<compile_context>
chip_gen: v5e
topology: v5e:2x2
jax: 0.10.0
libtpu: 0.0.40
codegen_flags: <defaults>
</compile_context>

<pallas_src>
import jax
import jax.numpy as jnp
from jax.experimental import pallas as pl
from jax.experimental.pallas import tpu as pltpu

_WPAD = 8  # sublane-aligned column offset of the staged tile inside the halo scratch


def _stage_tile(x_ref, xp_ref):
    """Stage the (H, W, Cin) tile into the zero-bordered halo scratch."""
    H, W, Cin = x_ref.shape
    Wtot = xp_ref.shape[1]
    dt = xp_ref.dtype
    # Zero only the border strips the shifted taps can read; the interior is
    # fully overwritten below (no full-buffer zero-fill).
    zrow = jnp.zeros((1, Wtot, Cin), dt)
    xp_ref[0:1, :, :] = zrow
    xp_ref[H + 1:H + 2, :, :] = zrow
    zcol = jnp.zeros((H, _WPAD, Cin), dt)
    xp_ref[1:H + 1, 0:_WPAD, :] = zcol
    xp_ref[1:H + 1, _WPAD + W:, :] = zcol
    xp_ref[1:H + 1, _WPAD:_WPAD + W, :] = x_ref[...]


def _im2col_kernel(x_ref, w_ref, b_ref, o_ref, xp_ref, patch_ref):
    # x_ref    : (H, W, Cin)             bf16 input tile (one batch element)
    # w_ref    : (9*Cin, 4*tc)           bf16 packed weights (one Cout tile)
    # b_ref    : (1, 4*tc)               f32  packed bias (tiled over phases)
    # o_ref    : (H*W, 4*tc)             bf16 output; column p*tc+c is phase p=2*py+px
    # xp_ref   : (H+2, W+2*_WPAD, Cin)   bf16 persistent halo scratch
    # patch_ref: (H*W, 9*Cin)            bf16 persistent im2col patch
    H, W, Cin = x_ref.shape

    # Stage + im2col once per batch element (j == 0); reuse for all Cout tiles.
    @pl.when(pl.program_id(1) == 0)
    def _():
        _stage_tile(x_ref, xp_ref)
        taps = [
            xp_ref[1 + dy:1 + dy + H, _WPAD + dx:_WPAD + dx + W, :]
            for dy in (-1, 0, 1) for dx in (-1, 0, 1)
        ]
        patch_ref[...] = jnp.concatenate(taps, axis=-1).reshape(H * W, 9 * Cin)

    # One MXU matmul per Cout tile: every tap and every sub-pixel phase at once.
    acc = jnp.dot(patch_ref[...], w_ref[...], preferred_element_type=jnp.float32)
    o_ref[...] = jnp.maximum(acc + b_ref[...], 0.0).astype(o_ref.dtype)


def _per_tap_kernel(x_ref, w_ref, b_ref, o_ref, xp_ref):
    # Channel-heavy path (Cin >= 128): nine accumulating K=Cin matmuls taken
    # directly from shifted halo-scratch views; no (H*W, 9*Cin) patch.
    H, W, Cin = x_ref.shape

    @pl.when(pl.program_id(1) == 0)
    def _():
        _stage_tile(x_ref, xp_ref)

    acc = None
    s = 0
    for dy in (-1, 0, 1):
        for dx in (-1, 0, 1):
            tap = xp_ref[1 + dy:1 + dy + H, _WPAD + dx:_WPAD + dx + W, :]
            d = jnp.dot(tap.reshape(H * W, Cin),
                        w_ref[s * Cin:(s + 1) * Cin, :],
                        preferred_element_type=jnp.float32)
            acc = d if acc is None else acc + d
            s += 1
    o_ref[...] = jnp.maximum(acc + b_ref[...], 0.0).astype(o_ref.dtype)


def _pack_weights(w, Cout_p, tc):
    """(Cin, Cout, 4, 4) conv-transpose weight -> (n_ct, 9*Cin, 4*tc) bf16."""
    Cin, Cout, KH, KW = w.shape
    if Cout_p != Cout:
        w = jnp.pad(w, ((0, 0), (0, Cout_p - Cout), (0, 0), (0, 0)))
    n_ct = Cout_p // tc
    blocks = []  # one (Cin, 4, Cout_p) block per shift s = (dy+1)*3 + (dx+1)
    for dy in (-1, 0, 1):
        for dx in (-1, 0, 1):
            phase_cols = []
            for py in (0, 1):
                for px in (0, 1):
                    kh = py + 1 - 2 * dy
                    kw = px + 1 - 2 * dx
                    if 0 <= kh < KH and 0 <= kw < KW:
                        phase_cols.append(w[:, :, kh, kw])
                    else:
                        phase_cols.append(jnp.zeros((Cin, Cout_p), w.dtype))
            blocks.append(jnp.stack(phase_cols, axis=1))        # (Cin, 4, Cout_p)
    wbig = jnp.concatenate(blocks, axis=0)                      # (9*Cin, 4, Cout_p)
    wt = wbig.reshape(9 * Cin, 4, n_ct, tc)
    wt = jnp.transpose(wt, (2, 0, 1, 3)).reshape(n_ct, 9 * Cin, 4 * tc)
    return wt.astype(jnp.bfloat16)


def _pack_bias(b, Cout_p, tc):
    """(Cout,) -> (n_ct, 1, 4*tc) f32, repeated for each of the 4 phases."""
    Cout = b.shape[0]
    if Cout_p != Cout:
        b = jnp.pad(b, (0, Cout_p - Cout))
    n_ct = Cout_p // tc
    bt = b.reshape(n_ct, 1, tc)
    return jnp.tile(bt, (1, 1, 4)).astype(jnp.float32)


def _choose_cout_tile(Cout, tile_cout):
    if tile_cout is not None:
        tc = int(tile_cout)
        return tc, ((Cout + tc - 1) // tc) * tc
    # Pad Cout to a multiple of 32 so 4*tc is a multiple of 128 (lane-dense,
    # unmasked stores); prefer 128/64 so N is MXU-aligned on v6e/v7x.
    Cout_p = ((Cout + 31) // 32) * 32
    for tc in (128, 64, 32):
        if Cout_p % tc == 0:
            return tc, Cout_p


def _vmem_limit_bytes(H, W, Cin, tc, use_im2col):
    bf, f4 = 2, 4
    x_blk = H * W * Cin * bf
    w_blk = 9 * Cin * 4 * tc * bf
    b_blk = 4 * tc * f4
    o_blk = H * W * 4 * tc * bf
    halo = (H + 2) * (W + 2 * _WPAD) * Cin * bf
    patch = H * W * 9 * Cin * bf if use_im2col else 0
    acc = H * W * 4 * tc * f4
    est = 2 * (x_blk + w_blk + b_blk + o_blk) + halo + patch + 2 * acc
    cap = 128 * 2 ** 20
    try:
        cap = int(pltpu.get_tpu_info().vmem_capacity_bytes)
    except Exception:
        pass
    return int(min(max(2 * est, 32 * 2 ** 20), cap))


def upsample_block(x_nchw, w, b, *, tile_cout=None):
    """ConvTranspose2d(Cin, Cout, kernel=4, stride=2, padding=1) + ReLU.

    x_nchw: (N, Cin, H, W)   w: (Cin, Cout, 4, 4)   b: (Cout,)
    returns: (N, Cout, 2H, 2W)  float32
    """
    N, Cin, H, W = x_nchw.shape
    Cout = w.shape[1]
    tc, Cout_p = _choose_cout_tile(Cout, tile_cout)
    n_ct = Cout_p // tc

    # Pad W to a multiple of 8 (exact: the extra zero columns reproduce the
    # zero halo; the matching output columns are sliced off below).
    Wp = ((W + 7) // 8) * 8

    # Single fused HBM input pass: NCHW -> NHWC + bf16 cast (+ optional W pad).
    x_nhwc = jnp.transpose(x_nchw, (0, 2, 3, 1)).astype(jnp.bfloat16)
    if Wp != W:
        x_nhwc = jnp.pad(x_nhwc, ((0, 0), (0, 0), (0, Wp - W), (0, 0)))

    w_packed = _pack_weights(w, Cout_p, tc)     # (n_ct, 9*Cin, 4*tc) bf16
    b_packed = _pack_bias(b, Cout_p, tc)        # (n_ct, 1, 4*tc)     f32

    # im2col (single K=9*Cin matmul) for small Cin; per-tap accumulating
    # matmuls (no materialized patch -> ~9x lower peak VMEM) when Cin >= 128.
    use_im2col = Cin < 128
    if use_im2col:
        kernel = _im2col_kernel
        scratch = [pltpu.VMEM((H + 2, Wp + 2 * _WPAD, Cin), jnp.bfloat16),
                   pltpu.VMEM((H * Wp, 9 * Cin), jnp.bfloat16)]
    else:
        kernel = _per_tap_kernel
        scratch = [pltpu.VMEM((H + 2, Wp + 2 * _WPAD, Cin), jnp.bfloat16)]

    out = pl.pallas_call(
        kernel,
        out_shape=jax.ShapeDtypeStruct((N, n_ct, H * Wp, 4 * tc), jnp.bfloat16),
        grid_spec=pltpu.PrefetchScalarGridSpec(
            num_scalar_prefetch=0,
            # j (Cout tiles) is the inner axis so the staged tile / im2col
            # patch is reused across all weight tiles of a batch element.
            # NOTE: for channel-heavy, tiny-spatial layers the packed weight
            # (then the larger operand) is re-streamed once per batch element;
            # swapping the axes (and dropping the hoist) wins in that regime.
            grid=(N, n_ct),
            in_specs=[
                pl.BlockSpec((None, H, Wp, Cin), lambda n, j: (n, 0, 0, 0)),
                pl.BlockSpec((None, 9 * Cin, 4 * tc), lambda n, j: (j, 0, 0)),
                pl.BlockSpec((None, 1, 4 * tc), lambda n, j: (j, 0, 0)),
            ],
            out_specs=pl.BlockSpec((None, None, H * Wp, 4 * tc),
                                   lambda n, j: (n, j, 0, 0)),
            scratch_shapes=scratch,
        ),
        compiler_params=pltpu.CompilerParams(
            # j must be "arbitrary": the pl.when(j == 0) staging relies on
            # sequential j on one core (must not be megacore-sharded).
            dimension_semantics=("parallel", "arbitrary"),
            vmem_limit_bytes=_vmem_limit_bytes(H, Wp, Cin, tc, use_im2col)),
    )(x_nhwc, w_packed, b_packed)

    # Single fused output pass: phase interleave + channels-last -> NCHW,
    # padding slice-off, and the bf16 -> f32 up-cast.
    y = out.reshape(N, n_ct, H, Wp, 2, 2, tc)           # (n, j, h, w, py, px, c)
    y = jnp.transpose(y, (0, 1, 6, 2, 4, 3, 5))          # (n, j, c, h, py, w, px)
    y = y.reshape(N, Cout_p, 2 * H, 2 * Wp)
    return y[:, :Cout, :, :2 * W].astype(jnp.float32)


def _reference_upsample_block(x, w, b):
    # Pure-JAX f32 reference: ConvTranspose2d == dilated conv with flipped kernel.
    w_flip = w[:, :, ::-1, ::-1]
    w_conv = jnp.transpose(w_flip, (1, 0, 2, 3))       # (Cout, Cin, kh, kw)
    y = jax.lax.conv_general_dilated(
        x, w_conv,
        window_strides=(1, 1),
        padding=[(2, 2), (2, 2)],                      # k - 1 - p = 2
        lhs_dilation=(2, 2),                           # stride of the transpose
        rhs_dilation=(1, 1),
        dimension_numbers=("NCHW", "OIHW", "NCHW"),
        precision=jax.lax.Precision.HIGHEST,
    )
    y = y + b[None, :, None, None]
    return jnp.maximum(y, 0.0)


def _run_case(key, N, Cin, Cout, H, W, wscale, tol):
    kx, kw_, kb = jax.random.split(key, 3)
    x = jax.random.normal(kx, (N, Cin, H, W), dtype=jnp.float32)
    w = wscale * jax.random.normal(kw_, (Cin, Cout, 4, 4), dtype=jnp.float32)
    b = wscale * jax.random.normal(kb, (Cout,), dtype=jnp.float32)

    y = jax.block_until_ready(jax.jit(upsample_block)(x, w, b))
    assert y.shape == (N, Cout, 2 * H, 2 * W), y.shape

    y_ref = jax.block_until_ready(_reference_upsample_block(x, w, b))
    max_err = float(jnp.max(jnp.abs(y - y_ref)))
    # bf16 operands + bf16 kernel output vs f32 reference -> relaxed tolerance.
    assert jnp.allclose(y, y_ref, rtol=tol, atol=tol), max_err


if __name__ == "__main__":
    key = jax.random.PRNGKey(0)
    k1, k2, k3 = jax.random.split(key, 3)

    # Case 1 (spec-sized): small channels -> im2col path, single Cout tile.
    _run_case(k1, N=2, Cin=4, Cout=8, H=16, W=16, wscale=0.1, tol=3e-2)

    # Case 2: channel-heavy -> per-tap accumulating-matmul path, 2 Cout tiles
    # (exercises the hoisted staging reuse across j).
    _run_case(k2, N=1, Cin=128, Cout=256, H=16, W=16, wscale=0.05, tol=5e-2)

    # Case 3: W not a multiple of 8 and Cout padded to 32-multiple
    # (exercises the wrapper padding / slice-off path, 3 Cout tiles).
    _run_case(k3, N=1, Cin=4, Cout=96, H=16, W=12, wscale=0.1, tol=3e-2)

    print("KERNEL_OK")
</pallas_src>

<mosaic_0001>
module attributes {stable_mosaic.version = 11 : i64} {
  func.func @_im2col_kernel(%arg0: i32, %arg1: i32, %arg2: memref<1x16x16x4xbf16, #tpu.memory_space<vmem>>, %arg3: memref<1x36x128xbf16, #tpu.memory_space<vmem>>, %arg4: memref<1x1x128xf32, #tpu.memory_space<vmem>>, %arg5: memref<1x1x256x128xbf16, #tpu.memory_space<vmem>>, %arg6: memref<18x32x4xbf16, #tpu.memory_space<vmem>>, %arg7: memref<256x36xbf16, #tpu.memory_space<vmem>>) attributes {dimension_semantics = [#tpu.dimension_semantics<parallel>, #tpu.dimension_semantics<arbitrary>], iteration_bounds = array<i64: 2, 1>, scalar_prefetch = 0 : i64, scratch_operands = 2 : i64, tpu.core_type = #tpu.core_type<tc>, window_params = [{transform_indices = @transform_0, window_bounds = array<i64: 1, 16, 16, 4>}, {transform_indices = @transform_1, window_bounds = array<i64: 1, 36, 128>}, {transform_indices = @transform_2, window_bounds = array<i64: 1, 1, 128>}, {transform_indices = @transform_3, window_bounds = array<i64: 1, 1, 256, 128>}]} {
    %c0_i32 = arith.constant 0 : i32
    %0 = arith.cmpi eq, %arg1, %c0_i32 : i32
    %1 = arith.extui %0 : i1 to i32
    %c0_i32_0 = arith.constant 0 : i32
    %2 = arith.cmpi ne, %1, %c0_i32_0 : i32
    scf.if %2 {
      %cst_13 = arith.constant 0.000000e+00 : bf16
      %17 = vector.broadcast %cst_13 : bf16 to vector<1x32x4xbf16>
      %c0_14 = arith.constant 0 : index
      %c0_15 = arith.constant 0 : index
      %c0_16 = arith.constant 0 : index
      %18 = vector.load %arg6[%c0_14, %c0_15, %c0_16] : memref<18x32x4xbf16, #tpu.memory_space<vmem>>, vector<1x32x4xbf16>
      tpu.vector_store %arg6[%c0_14, %c0_15, %c0_16], %17 {strides = array<i32>} : memref<18x32x4xbf16, #tpu.memory_space<vmem>>, vector<1x32x4xbf16>,
      %c17 = arith.constant 17 : index
      %c0_17 = arith.constant 0 : index
      %c0_18 = arith.constant 0 : index
      %19 = vector.load %arg6[%c17, %c0_17, %c0_18] : memref<18x32x4xbf16, #tpu.memory_space<vmem>>, vector<1x32x4xbf16>
      tpu.vector_store %arg6[%c17, %c0_17, %c0_18], %17 {strides = array<i32>} : memref<18x32x4xbf16, #tpu.memory_space<vmem>>, vector<1x32x4xbf16>,
      %cst_19 = arith.constant 0.000000e+00 : bf16
      %20 = vector.broadcast %cst_19 : bf16 to vector<16x8x4xbf16>
      %c1 = arith.constant 1 : index
      %c0_20 = arith.constant 0 : index
      %c0_21 = arith.constant 0 : index
      %21 = vector.load %arg6[%c1, %c0_20, %c0_21] : memref<18x32x4xbf16, #tpu.memory_space<vmem>>, vector<16x8x4xbf16>
      tpu.vector_store %arg6[%c1, %c0_20, %c0_21], %20 {strides = array<i32>} : memref<18x32x4xbf16, #tpu.memory_space<vmem>>, vector<16x8x4xbf16>,
      %c1_22 = arith.constant 1 : index
      %c24 = arith.constant 24 : index
      %c0_23 = arith.constant 0 : index
      %22 = vector.load %arg6[%c1_22, %c24, %c0_23] : memref<18x32x4xbf16, #tpu.memory_space<vmem>>, vector<16x8x4xbf16>
      tpu.vector_store %arg6[%c1_22, %c24, %c0_23], %20 {strides = array<i32>} : memref<18x32x4xbf16, #tpu.memory_space<vmem>>, vector<16x8x4xbf16>,
      %c0_24 = arith.constant 0 : index
      %c0_25 = arith.constant 0 : index
      %c0_26 = arith.constant 0 : index
      %c0_27 = arith.constant 0 : index
      %23 = vector.load %arg2[%c0_24, %c0_25, %c0_26, %c0_27] : memref<1x16x16x4xbf16, #tpu.memory_space<vmem>>, vector<1x16x16x4xbf16>
      %24 = vector.shape_cast %23 : vector<1x16x16x4xbf16> to vector<16x16x4xbf16>
      %c1_28 = arith.constant 1 : index
      %c8 = arith.constant 8 : index
      %c0_29 = arith.constant 0 : index
      %25 = vector.load %arg6[%c1_28, %c8, %c0_29] : memref<18x32x4xbf16, #tpu.memory_space<vmem>>, vector<16x16x4xbf16>
      tpu.vector_store %arg6[%c1_28, %c8, %c0_29], %24 {strides = array<i32>} : memref<18x32x4xbf16, #tpu.memory_space<vmem>>, vector<16x16x4xbf16>,
      %c0_30 = arith.constant 0 : index
      %c7 = arith.constant 7 : index
      %c0_31 = arith.constant 0 : index
      %26 = vector.load %arg6[%c0_30, %c7, %c0_31] : memref<18x32x4xbf16, #tpu.memory_space<vmem>>, vector<16x16x4xbf16>
      %c0_32 = arith.constant 0 : index
      %c8_33 = arith.constant 8 : index
      %c0_34 = arith.constant 0 : index
      %27 = vector.load %arg6[%c0_32, %c8_33, %c0_34] : memref<18x32x4xbf16, #tpu.memory_space<vmem>>, vector<16x16x4xbf16>
      %c0_35 = arith.constant 0 : index
      %c9 = arith.constant 9 : index
      %c0_36 = arith.constant 0 : index
      %28 = vector.load %arg6[%c0_35, %c9, %c0_36] : memref<18x32x4xbf16, #tpu.memory_space<vmem>>, vector<16x16x4xbf16>
      %c1_37 = arith.constant 1 : index
      %c7_38 = arith.constant 7 : index
      %c0_39 = arith.constant 0 : index
      %29 = vector.load %arg6[%c1_37, %c7_38, %c0_39] : memref<18x32x4xbf16, #tpu.memory_space<vmem>>, vector<16x16x4xbf16>
      %c1_40 = arith.constant 1 : index
      %c8_41 = arith.constant 8 : index
      %c0_42 = arith.constant 0 : index
      %30 = vector.load %arg6[%c1_40, %c8_41, %c0_42] : memref<18x32x4xbf16, #tpu.memory_space<vmem>>, vector<16x16x4xbf16>
      %c1_43 = arith.constant 1 : index
      %c9_44 = arith.constant 9 : index
      %c0_45 = arith.constant 0 : index
      %31 = vector.load %arg6[%c1_43, %c9_44, %c0_45] : memref<18x32x4xbf16, #tpu.memory_space<vmem>>, vector<16x16x4xbf16>
      %c2 = arith.constant 2 : index
      %c7_46 = arith.constant 7 : index
      %c0_47 = arith.constant 0 : index
      %32 = vector.load %arg6[%c2, %c7_46, %c0_47] : memref<18x32x4xbf16, #tpu.memory_space<vmem>>, vector<16x16x4xbf16>
      %c2_48 = arith.constant 2 : index
      %c8_49 = arith.constant 8 : index
      %c0_50 = arith.constant 0 : index
      %33 = vector.load %arg6[%c2_48, %c8_49, %c0_50] : memref<18x32x4xbf16, #tpu.memory_space<vmem>>, vector<16x16x4xbf16>
      %c2_51 = arith.constant 2 : index
      %c9_52 = arith.constant 9 : index
      %c0_53 = arith.constant 0 : index
      %34 = vector.load %arg6[%c2_51, %c9_52, %c0_53] : memref<18x32x4xbf16, #tpu.memory_space<vmem>>, vector<16x16x4xbf16>
      %35 = tpu.concatenate %26, %27, %28, %29, %30, %31, %32, %33, %34 in 2 : vector<16x16x4xbf16>, vector<16x16x4xbf16>, vector<16x16x4xbf16>, vector<16x16x4xbf16>, vector<16x16x4xbf16>, vector<16x16x4xbf16>, vector<16x16x4xbf16>, vector<16x16x4xbf16>, vector<16x16x4xbf16> -> vector<16x16x36xbf16>
      %36 = vector.shape_cast %35 : vector<16x16x36xbf16> to vector<256x36xbf16>
      %c0_54 = arith.constant 0 : index
      %c0_55 = arith.constant 0 : index
      %37 = vector.load %arg7[%c0_54, %c0_55] : memref<256x36xbf16, #tpu.memory_space<vmem>>, vector<256x36xbf16>
      tpu.vector_store %arg7[%c0_54, %c0_55], %36 {strides = array<i32>} : memref<256x36xbf16, #tpu.memory_space<vmem>>, vector<256x36xbf16>,
    } else {
    }
    %c0 = arith.constant 0 : index
    %c0_1 = arith.constant 0 : index
    %3 = vector.load %arg7[%c0, %c0_1] : memref<256x36xbf16, #tpu.memory_space<vmem>>, vector<256x36xbf16>
    %c0_2 = arith.constant 0 : index
    %c0_3 = arith.constant 0 : index
    %c0_4 = arith.constant 0 : index
    %4 = vector.load %arg3[%c0_2, %c0_3, %c0_4] : memref<1x36x128xbf16, #tpu.memory_space<vmem>>, vector<1x36x128xbf16>
    %5 = vector.shape_cast %4 : vector<1x36x128xbf16> to vector<36x128xbf16>
    %cst = arith.constant dense<0.000000e+00> : vector<256x128xf32>
    %6 = tpu.matmul %3, %5, %cst {dimension_numbers = #tpu.dot_dimension_numbers<[1], [0], [0], [1], [0, 0, 1, 1], [], []>} : vector<256x36xbf16>, vector<36x128xbf16>, vector<256x128xf32> -> vector<256x128xf32>
    %c0_5 = arith.constant 0 : index
    %c0_6 = arith.constant 0 : index
    %c0_7 = arith.constant 0 : index
    %7 = vector.load %arg4[%c0_5, %c0_6, %c0_7] : memref<1x1x128xf32, #tpu.memory_space<vmem>>, vector<1x1x128xf32>
    %8 = vector.shape_cast %7 : vector<1x1x128xf32> to vector<1x128xf32>
    %9 = vector.broadcast %8 : vector<1x128xf32> to vector<256x128xf32>
    %10 = arith.addf %6, %9 : vector<256x128xf32>
    %cst_8 = arith.constant 0.000000e+00 : f32
    %11 = vector.broadcast %cst_8 : f32 to vector<256x128xf32>
    %12 = arith.maximumf %10, %11 : vector<256x128xf32>
    %13 = arith.truncf %12 : vector<256x128xf32> to vector<256x128xbf16>
    %c0_9 = arith.constant 0 : index
    %c0_10 = arith.constant 0 : index
    %c0_11 = arith.constant 0 : index
    %c0_12 = arith.constant 0 : index
    %14 = vector.load %arg5[%c0_9, %c0_10, %c0_11, %c0_12] : memref<1x1x256x128xbf16, #tpu.memory_space<vmem>>, vector<1x1x256x128xbf16>
    %15 = vector.shape_cast %14 : vector<1x1x256x128xbf16> to vector<256x128xbf16>
    %16 = vector.shape_cast %13 : vector<256x128xbf16> to vector<1x1x256x128xbf16>
    tpu.vector_store %arg5[%c0_9, %c0_10, %c0_11, %c0_12], %16 {strides = array<i32>} : memref<1x1x256x128xbf16, #tpu.memory_space<vmem>>, vector<1x1x256x128xbf16>,
    return
  }
  func.func @transform_0(%arg0: i32, %arg1: i32) -> (i32, i32, i32, i32) {
    %c0_i32 = arith.constant 0 : i32
    %c0_i32_0 = arith.constant 0 : i32
    %c0_i32_1 = arith.constant 0 : i32
    %c0_i32_2 = arith.constant 0 : i32
    return %arg0, %c0_i32, %c0_i32_0, %c0_i32_1 : i32, i32, i32, i32
  }
  func.func @transform_1(%arg0: i32, %arg1: i32) -> (i32, i32, i32) {
    %c0_i32 = arith.constant 0 : i32
    %c0_i32_0 = arith.constant 0 : i32
    %c0_i32_1 = arith.constant 0 : i32
    return %arg1, %c0_i32, %c0_i32_0 : i32, i32, i32
  }
  func.func @transform_2(%arg0: i32, %arg1: i32) -> (i32, i32, i32) {
    %c0_i32 = arith.constant 0 : i32
    %c0_i32_0 = arith.constant 0 : i32
    %c0_i32_1 = arith.constant 0 : i32
    return %arg1, %c0_i32, %c0_i32_0 : i32, i32, i32
  }
  func.func @transform_3(%arg0: i32, %arg1: i32) -> (i32, i32, i32, i32) {
    %c0_i32 = arith.constant 0 : i32
    %c0_i32_0 = arith.constant 0 : i32
    %c0_i32_1 = arith.constant 0 : i32
    return %arg0, %arg1, %c0_i32, %c0_i32_0 : i32, i32, i32, i32
  }
}

</mosaic_0001>

<llo_original>
// kernel: upsample_block.1
$region0: #{upsample_block.1}
  #allocation0 [shape = 'u32[]', space=smem, size = 0x4, offset = 0x4, fixed_abs, tag = 'smem constant byte address 0x4 - core index']
  #allocation1 [shape = 'u32[72,128]{1,0:T(1,128)}', space=vmem, size = 0x9000, scoped, tag = 'internal scratch']
  #allocation2 [shape = 'bf16[18,32,4]{2,1,0:T(8,128)(2,1)}', space=vmem, size = 0x24000, scoped, tag = 'scratch operand']
  #allocation3 [shape = 'bf16[256,36]{1,0:T(8,128)(2,1)}', space=vmem, size = 0x10000, scoped, tag = 'scratch operand']
  %s0 = inlined_call_operand.vmem [shape: bf16[2,16,16,4], index: 0, kind: input, shape index: {}]
  %s1 = inlined_call_operand.vmem [shape: bf16[1,36,128], index: 1, kind: input, shape index: {}]
  %s2 = inlined_call_operand.vmem [shape: f32[1,1,128], index: 2, kind: input, shape index: {}]
  %s3 = inlined_call_operand.vmem [shape: bf16[2,1,256,128], index: 3, kind: output, shape index: {}]
  %s4 = sld [smem:[#allocation0]]
  $region49: #{upsample_block.1} parent=0
    _
  %s6 = ssub.s32 1, %s4
  %s7 = scalar_select 0, %s6, %s4
  loop: start=0, step=1, limit=4
  $region2: #{upsample_block.1} parent=0 // loop_pre_header
    _
  $region3: #{upsample_block.1} parent=0 // loop_header
    %s9 = sphi 0, %s13
    %p10 = scmp.ge.s32.totalorder %s9, 4
    %s16 = sphi 0, %s28
    %s17 = sphi 0, %s24
    %s18 = sphi 0, %s16
    %s19 = sphi 0, %s17
    %s20 = sphi 0, %s18
    %s21 = sphi 0, %s19
    %s31 = sphi 0, %s33
    %s34 = sphi 0, %s31
    %s35 = sphi 0, %s34
    %s51 = sphi 0, %s35
    %s57 = sphi 0, %s59
    %s60 = sphi 0, %s57
    %s61 = sphi 0, %s60
    %s77 = sphi 0, %s61
    %s83 = sphi 0, %s85
    %s86 = sphi 0, %s83
    %s87 = sphi 0, %s86
    %s103 = sphi 0, %s87
    %s111 = sphi 0, %s113
    %s114 = sphi 0, %s111
    %s115 = sphi 0, %s114
    %s131 = sphi 0, %s115
  $region4: #{upsample_block.1} parent=0 // loop_header_branch
    %12 = sbr.rel (%p10) target = $region8
  $region5: #{upsample_block.1} parent=0 // loop_body
    %s14 = ssub.s32 %s9, 1
    %s15 = ssub.s32 %s9, 2
    %s22 = sadd.s32 1, %s17
    %p23 = scmp.ge.s32.totalorder %s22, 1
    %s24 = scalar_select %p23, 0, %s22
    %s25 = sadd.s32 1, %s16
    %s26 = scalar_select %p23, %s25, %s16
    %p27 = scmp.ge.s32.totalorder %s26, 2
    %s28 = scalar_select %p27, 0, %s26
    %s29 = ssub.s32 %s16, %s28
    %p30 = scmp.eq.s32.totalorder %s29, 0
    %s32 = sadd.s32 %s31, 1
    %s33 = scalar_select %p30, %s31, %s32
    %p36 = pneg %p30
    %p37 = scmp.eq.s32.totalorder %s9, 1
    %p38 = por %p36, %p37
    %p39 = scmp.ne.s32.totalorder %s31, %s34
    %p40 = scmp.eq.s32.totalorder %s9, 0
    %p41 = por %p39, %p40
    %p42 = scmp.ne.s32.totalorder %s31, %s34
    %p43 = scmp.eq.s32.totalorder %s14, 1
    %p44 = por %p42, %p43
    %p45 = scmp.ne.s32.totalorder %s34, %s35
    %p46 = scmp.eq.s32.totalorder %s14, 0
    %p47 = por %p45, %p46
    %p48 = scmp.ne.s32.totalorder %s34, %s35
    %p49 = scmp.eq.s32.totalorder %s15, 1
    %p50 = por %p48, %p49
    %p52 = scmp.ne.s32.totalorder %s35, %s51
    %p53 = scmp.eq.s32.totalorder %s15, 0
    %p54 = por %p52, %p53
    %s55 = ssub.s32 %s17, %s24
    %p56 = scmp.eq.s32.totalorder %s55, 0
    %s58 = sadd.s32 %s57, 1
    %s59 = scalar_select %p56, %s57, %s58
    %p62 = pneg %p56
    %p63 = scmp.eq.s32.totalorder %s9, 1
    %p64 = por %p62, %p63
    %p65 = scmp.ne.s32.totalorder %s57, %s60
    %p66 = scmp.eq.s32.totalorder %s9, 0
    %p67 = por %p65, %p66
    %p68 = scmp.ne.s32.totalorder %s57, %s60
    %p69 = scmp.eq.s32.totalorder %s14, 1
    %p70 = por %p68, %p69
    %p71 = scmp.ne.s32.totalorder %s60, %s61
    %p72 = scmp.eq.s32.totalorder %s14, 0
    %p73 = por %p71, %p72
    %p74 = scmp.ne.s32.totalorder %s60, %s61
    %p75 = scmp.eq.s32.totalorder %s15, 1
    %p76 = por %p74, %p75
    %p78 = scmp.ne.s32.totalorder %s61, %s77
    %p79 = scmp.eq.s32.totalorder %s15, 0
    %p80 = por %p78, %p79
    %s81 = ssub.s32 %s17, %s24
    %p82 = scmp.eq.s32.totalorder %s81, 0
    %s84 = sadd.s32 %s83, 1
    %s85 = scalar_select %p82, %s83, %s84
    %p88 = pneg %p82
    %p89 = scmp.eq.s32.totalorder %s9, 1
    %p90 = por %p88, %p89
    %p91 = scmp.ne.s32.totalorder %s83, %s86
    %p92 = scmp.eq.s32.totalorder %s9, 0
    %p93 = por %p91, %p92
    %p94 = scmp.ne.s32.totalorder %s83, %s86
    %p95 = scmp.eq.s32.totalorder %s14, 1
    %p96 = por %p94, %p95
    %p97 = scmp.ne.s32.totalorder %s86, %s87
    %p98 = scmp.eq.s32.totalorder %s14, 0
    %p99 = por %p97, %p98
    %p100 = scmp.ne.s32.totalorder %s86, %s87
    %p101 = scmp.eq.s32.totalorder %s15, 1
    %p102 = por %p100, %p101
    %p104 = scmp.ne.s32.totalorder %s87, %s103
    %p105 = scmp.eq.s32.totalorder %s15, 0
    %p106 = por %p104, %p105
    %s107 = ssub.s32 %s16, %s28
    %s108 = ssub.s32 %s17, %s24
    %s109 = sor.u32 %s107, %s108
    %p110 = scmp.eq.s32.totalorder %s109, 0
    %s112 = sadd.s32 %s111, 1
    %s113 = scalar_select %p110, %s111, %s112
    %p116 = pneg %p110
    %p117 = scmp.eq.s32.totalorder %s9, 1
    %p118 = por %p116, %p117
    %p119 = scmp.ne.s32.totalorder %s111, %s114
    %p120 = scmp.eq.s32.totalorder %s9, 0
    %p121 = por %p119, %p120
    %p122 = scmp.ne.s32.totalorder %s111, %s114
    %p123 = scmp.eq.s32.totalorder %s14, 1
    %p124 = por %p122, %p123
    %p125 = scmp.ne.s32.totalorder %s114, %s115
    %p126 = scmp.eq.s32.totalorder %s14, 0
    %p127 = por %p125, %p126
    %p128 = scmp.ne.s32.totalorder %s114, %s115
    %p129 = scmp.eq.s32.totalorder %s15, 1
    %p130 = por %p128, %p129
    %p132 = scmp.ne.s32.totalorder %s115, %s131
    %p133 = scmp.eq.s32.totalorder %s15, 0
    %p134 = por %p132, %p133
    %p135 = scmp.le.s32.totalorder 1, %s9
    %p136 = scmp.lt.s32.totalorder %s9, 3
    %p137 = pnand %p135, %p136
    %p138 = pneg %p137
    // Predicated region
    $region9: #{upsample_block.1} parent=5 // pred_check
      _
    $region10: #{upsample_block.1} parent=5 // pred_check_branch
      %140 = sbr.rel (%p137) target = $region12
    $region11: #{upsample_block.1} parent=5 // pred_region
      %s141 = ssub.s32 %s9, 1
      // Predicated region
      $region13: #{upsample_block.1} parent=11 // pred_check
        %p142 = pneg %p73
      $region14: #{upsample_block.1} parent=11 // pred_check_branch
        %144 = sbr.rel (%p142) target = $region16
      $region15: #{upsample_block.1} parent=11 // pred_region
        %p145 = scmp.lt.s32.totalorder %s19, 0
        %s146 = scalar_select %p145, %s19, 0
        %s147 = smul.addr %s146, 5
        %s148 = smul.addr %s147, 4
        %s149 = scalar_lea.vmem %s1, %s148
      $region16: #{upsample_block.1} parent=11 // pred_fallthru
        _
      // Predicated region
      $region17: #{upsample_block.1} parent=11 // pred_check
        %p150 = pneg %p99
      $region18: #{upsample_block.1} parent=11 // pred_check_branch
        %152 = sbr.rel (%p150) target = $region20
      $region19: #{upsample_block.1} parent=11 // pred_region
        %p153 = scmp.lt.s32.totalorder %s19, 0
        %s154 = scalar_select %p153, %s19, 0
        %s155 = scalar_lea.vmem %s2, %s154
      $region20: #{upsample_block.1} parent=11 // pred_fallthru
        _
    $region12: #{upsample_block.1} parent=5 // pred_fallthru
      _
    %p156 = scmp.lt.s32.totalorder %s9, 2
    // Predicated region
    $region21: #{upsample_block.1} parent=5 // pred_check
      %p157 = pneg %p156
    $region22: #{upsample_block.1} parent=5 // pred_check_branch
      %159 = sbr.rel (%p157) target = $region24
    $region23: #{upsample_block.1} parent=5 // pred_region
      // Predicated region
      $region25: #{upsample_block.1} parent=23 // pred_check
        %p160 = pneg %p41
      $region26: #{upsample_block.1} parent=23 // pred_check_branch
        %162 = sbr.rel (%p160) target = $region28
      $region27: #{upsample_block.1} parent=23 // pred_region
        %p163 = scmp.lt.s32.totalorder %s16, 1
        %s164 = scalar_select %p163, %s16, 1
        %s165 = smul.addr %s164, 32
        %s166 = smul.addr %s165, 4
        %s167 = scalar_lea.vmem %s0, %s166
      $region28: #{upsample_block.1} parent=23 // pred_fallthru
        _
    $region24: #{upsample_block.1} parent=5 // pred_fallthru
      _
    %p168 = scmp.le.s32.totalorder 1, %s9
    %p169 = scmp.lt.s32.totalorder %s9, 3
    %p170 = pnand %p168, %p169
    %p171 = pneg %p170
    // Predicated region
    $region29: #{upsample_block.1} parent=5 // pred_check
      _
    $region30: #{upsample_block.1} parent=5 // pred_check_branch
      %173 = sbr.rel (%p170) target = $region32
    $region31: #{upsample_block.1} parent=5 // pred_region
      %s174 = ssub.s32 %s9, 1
      %p175 = scmp.lt.s32.totalorder %s18, 1
      %s176 = scalar_select %p175, %s18, 1
      %s177 = smul.addr %s176, 32
      %s178 = smul.addr %s177, 4
      %s179 = scalar_lea.vmem %s0, %s178
      %p180 = pneg %p47
      %p181 = pneg %p44
      %p182 = scmp.lt.s32.totalorder %s19, 0
      %s183 = scalar_select %p182, %s19, 0
      %s184 = smul.addr %s183, 5
      %s185 = smul.addr %s184, 4
      %s186 = scalar_lea.vmem %s1, %s185
      %p187 = pneg %p73
      %p188 = pneg %p70
      %p189 = scmp.lt.s32.totalorder %s19, 0
      %s190 = scalar_select %p189, %s19, 0
      %s191 = scalar_lea.vmem %s2, %s190
      %p192 = pneg %p99
      %p193 = pneg %p96
      %p194 = pneg %p127
      %p195 = pneg %p124
      %p196 = scmp.lt.s32.totalorder %s18, 1
      %s197 = scalar_select %p196, %s18, 1
      %p198 = scmp.lt.s32.totalorder %s19, 0
      %s199 = scalar_select %p198, %s19, 0
      %s200 = smul.addr %s199, 32
      %s201 = smul.addr %s197, 32
      %s202 = sadd.s32 %s200, %s201
      %s203 = smul.addr %s202, 4
      %s204 = scalar_lea.vmem %s3, %s203
      %p205 = scmp.lt.s32.totalorder %s18, 1
      %s206 = scalar_select %p205, %s18, 1
      %s207 = smul.addr %s206, 32
      %s208 = smul.addr %s207, 4
      %s209 = scalar_lea.vmem %s0, %s208
      %p210 = scmp.lt.s32.totalorder %s19, 0
      %s211 = scalar_select %p210, %s19, 0
      %s212 = smul.addr %s211, 5
      %s213 = smul.addr %s212, 4
      %s214 = scalar_lea.vmem %s1, %s213
      %p215 = scmp.lt.s32.totalorder %s19, 0
      %s216 = scalar_select %p215, %s19, 0
      %s217 = scalar_lea.vmem %s2, %s216
      %p218 = scmp.lt.s32.totalorder %s18, 1
      %s219 = scalar_select %p218, %s18, 1
      %p220 = scmp.lt.s32.totalorder %s19, 0
      %s221 = scalar_select %p220, %s19, 0
      %s222 = smul.addr %s221, 32
      %s223 = smul.addr %s219, 32
      %s224 = sadd.s32 %s222, %s223
      %s225 = smul.addr %s224, 4
      %s226 = scalar_lea.vmem %s3, %s225
      %p228 = scmp.eq.s32.totalorder %s19, 0
      // Predicated region
      $region33: #{upsample_block.1} parent=31 // pred_check
        %p229 = pneg %p228
      $region34: #{upsample_block.1} parent=31 // pred_check_branch
        %231 = sbr.rel (%p229) target = $region36
      $region35: #{upsample_block.1} parent=31 // pred_region
        %vm232 = vcmask 27648
        %233 = vst.msk [vmem:[#allocation2] sm:$0xf] %vm232, 0
        %234 = vst.msk [vmem:[#allocation2 + $0x4] sm:$0xf] %vm232, 0
        %235 = vst.msk [vmem:[#allocation2 + $0x8] sm:$0xf] %vm232, 0
        %236 = vst.msk [vmem:[#allocation2 + $0xc] sm:$0xf] %vm232, 0
        %s237 = scalar_lea.vmem [#allocation2], 272
        %238 = vst.msk [vmem:[%s237] sm:$0xf] %vm232, 0
        %239 = vst.msk [vmem:[%s237 + $0x4] sm:$0xf] %vm232, 0
        %240 = vst.msk [vmem:[%s237 + $0x8] sm:$0xf] %vm232, 0
        %241 = vst.msk [vmem:[%s237 + $0xc] sm:$0xf] %vm232, 0
        %s242 = scalar_lea.vmem [#allocation2], 16
        %243 = vst.msk [vmem:[%s242] sm:$0xf] %vm232, 0
        %244 = vst.msk [vmem:[%s242 + $0x10] sm:$0xf] %vm232, 0
        %245 = vst.msk [vmem:[%s242 + $0x20] sm:$0xf] %vm232, 0
        %246 = vst.msk [vmem:[%s242 + $0x30] sm:$0xf] %vm232, 0
        %247 = vst.msk [vmem:[%s242 + $0x40] sm:$0xf] %vm232, 0
        %248 = vst.msk [vmem:[%s242 + $0x50] sm:$0xf] %vm232, 0
        %249 = vst.msk [vmem:[%s242 + $0x60] sm:$0xf] %vm232, 0
        %250 = vst.msk [vmem:[%s242 + $0x70] sm:$0xf] %vm232, 0
        %251 = vst.msk [vmem:[%s242 + $0x80] sm:$0xf] %vm232, 0
        %252 = vst.msk [vmem:[%s242 + $0x90] sm:$0xf] %vm232, 0
        %253 = vst.msk [vmem:[%s242 + $0xa0] sm:$0xf] %vm232, 0
        %254 = vst.msk [vmem:[%s242 + $0xb0] sm:$0xf] %vm232, 0
        %255 = vst.msk [vmem:[%s242 + $0xc0] sm:$0xf] %vm232, 0
        %256 = vst.msk [vmem:[%s242 + $0xd0] sm:$0xf] %vm232, 0
        %257 = vst.msk [vmem:[%s242 + $0xe0] sm:$0xf] %vm232, 0
        %258 = vst.msk [vmem:[%s242 + $0xf0] sm:$0xf] %vm232, 0
        %259 = vst.msk [vmem:[%s242 + $0xc] sm:$0xf] %vm232, 0
        %260 = vst.msk [vmem:[%s242 + $0x1c] sm:$0xf] %vm232, 0
        %261 = vst.msk [vmem:[%s242 + $0x2c] sm:$0xf] %vm232, 0
        %262 = vst.msk [vmem:[%s242 + $0x3c] sm:$0xf] %vm232, 0
        %263 = vst.msk [vmem:[%s242 + $0x4c] sm:$0xf] %vm232, 0
        %264 = vst.msk [vmem:[%s242 + $0x5c] sm:$0xf] %vm232, 0
        %265 = vst.msk [vmem:[%s242 + $0x6c] sm:$0xf] %vm232, 0
        %266 = vst.msk [vmem:[%s242 + $0x7c] sm:$0xf] %vm232, 0
        %267 = vst.msk [vmem:[%s242 + $0x8c] sm:$0xf] %vm232, 0
        %268 = vst.msk [vmem:[%s242 + $0x9c] sm:$0xf] %vm232, 0
        %269 = vst.msk [vmem:[%s242 + $0xac] sm:$0xf] %vm232, 0
        %270 = vst.msk [vmem:[%s242 + $0xbc] sm:$0xf] %vm232, 0
        %271 = vst.msk [vmem:[%s242 + $0xcc] sm:$0xf] %vm232, 0
        %272 = vst.msk [vmem:[%s242 + $0xdc] sm:$0xf] %vm232, 0
        %273 = vst.msk [vmem:[%s242 + $0xec] sm:$0xf] %vm232, 0
        %274 = vst.msk [vmem:[%s242 + $0xfc] sm:$0xf] %vm232, 0
        %v275 = vld [vmem:[%s209] sm:$0xf]
        %v276 = vld [vmem:[%s209 + $0x4] sm:$0xf]
        %v277 = vld [vmem:[%s209 + $0x8] sm:$0xf]
        %v278 = vld [vmem:[%s209 + $0xc] sm:$0xf]
        %v279 = vld [vmem:[%s209 + $0x10] sm:$0xf]
        %v280 = vld [vmem:[%s209 + $0x14] sm:$0xf]
        %v281 = vld [vmem:[%s209 + $0x18] sm:$0xf]
        %v282 = vld [vmem:[%s209 + $0x1c] sm:$0xf]
        %v283 = vld [vmem:[%s209 + $0x20] sm:$0xf]
        %v284 = vld [vmem:[%s209 + $0x24] sm:$0xf]
        %v285 = vld [vmem:[%s209 + $0x28] sm:$0xf]
        %v286 = vld [vmem:[%s209 + $0x2c] sm:$0xf]
        %v287 = vld [vmem:[%s209 + $0x30] sm:$0xf]
        %v288 = vld [vmem:[%s209 + $0x34] sm:$0xf]
        %v289 = vld [vmem:[%s209 + $0x38] sm:$0xf]
        %v290 = vld [vmem:[%s209 + $0x3c] sm:$0xf]
        %v291 = vld [vmem:[%s209 + $0x40] sm:$0xf]
        %v292 = vld [vmem:[%s209 + $0x44] sm:$0xf]
        %v293 = vld [vmem:[%s209 + $0x48] sm:$0xf]
        %v294 = vld [vmem:[%s209 + $0x4c] sm:$0xf]
        %v295 = vld [vmem:[%s209 + $0x50] sm:$0xf]
        %v296 = vld [vmem:[%s209 + $0x54] sm:$0xf]
        %v297 = vld [vmem:[%s209 + $0x58] sm:$0xf]
        %v298 = vld [vmem:[%s209 + $0x5c] sm:$0xf]
        %v299 = vld [vmem:[%s209 + $0x60] sm:$0xf]
        %v300 = vld [vmem:[%s209 + $0x64] sm:$0xf]
        %v301 = vld [vmem:[%s209 + $0x68] sm:$0xf]
        %v302 = vld [vmem:[%s209 + $0x6c] sm:$0xf]
        %v303 = vld [vmem:[%s209 + $0x70] sm:$0xf]
        %v304 = vld [vmem:[%s209 + $0x74] sm:$0xf]
        %v305 = vld [vmem:[%s209 + $0x78] sm:$0xf]
        %v306 = vld [vmem:[%s209 + $0x7c] sm:$0xf]
        %307 = vst.msk [vmem:[%s242 + $0x4] sm:$0xf] %vm232, %v275
        %308 = vst.msk [vmem:[%s242 + $0x8] sm:$0xf] %vm232, %v276
        %309 = vst.msk [vmem:[%s242 + $0x14] sm:$0xf] %vm232, %v277
        %310 = vst.msk [vmem:[%s242 + $0x18] sm:$0xf] %vm232, %v278
        %311 = vst.msk [vmem:[%s242 + $0x24] sm:$0xf] %vm232, %v279
        %312 = vst.msk [vmem:[%s242 + $0x28] sm:$0xf] %vm232, %v280
        %313 = vst.msk [vmem:[%s242 + $0x34] sm:$0xf] %vm232, %v281
        %314 = vst.msk [vmem:[%s242 + $0x38] sm:$0xf] %vm232, %v282
        %315 = vst.msk [vmem:[%s242 + $0x44] sm:$0xf] %vm232, %v283
        %316 = vst.msk [vmem:[%s242 + $0x48] sm:$0xf] %vm232, %v284
        %317 = vst.msk [vmem:[%s242 + $0x54] sm:$0xf] %vm232, %v285
        %318 = vst.msk [vmem:[%s242 + $0x58] sm:$0xf] %vm232, %v286
        %319 = vst.msk [vmem:[%s242 + $0x64] sm:$0xf] %vm232, %v287
        %320 = vst.msk [vmem:[%s242 + $0x68] sm:$0xf] %vm232, %v288
        %321 = vst.msk [vmem:[%s242 + $0x74] sm:$0xf] %vm232, %v289
        %322 = vst.msk [vmem:[%s242 + $0x78] sm:$0xf] %vm232, %v290
        %323 = vst.msk [vmem:[%s242 + $0x84] sm:$0xf] %vm232, %v291
        %324 = vst.msk [vmem:[%s242 + $0x88] sm:$0xf] %vm232, %v292
        %325 = vst.msk [vmem:[%s242 + $0x94] sm:$0xf] %vm232, %v293
        %326 = vst.msk [vmem:[%s242 + $0x98] sm:$0xf] %vm232, %v294
        %327 = vst.msk [vmem:[%s242 + $0xa4] sm:$0xf] %vm232, %v295
        %328 = vst.msk [vmem:[%s242 + $0xa8] sm:$0xf] %vm232, %v296
        %329 = vst.msk [vmem:[%s242 + $0xb4] sm:$0xf] %vm232, %v297
        %330 = vst.msk [vmem:[%s242 + $0xb8] sm:$0xf] %vm232, %v298
        %331 = vst.msk [vmem:[%s242 + $0xc4] sm:$0xf] %vm232, %v299
        %332 = vst.msk [vmem:[%s242 + $0xc8] sm:$0xf] %vm232, %v300
        %333 = vst.msk [vmem:[%s242 + $0xd4] sm:$0xf] %vm232, %v301
        %334 = vst.msk [vmem:[%s242 + $0xd8] sm:$0xf] %vm232, %v302
        %335 = vst.msk [vmem:[%s242 + $0xe4] sm:$0xf] %vm232, %v303
        %336 = vst.msk [vmem:[%s242 + $0xe8] sm:$0xf] %vm232, %v304
        %337 = vst.msk [vmem:[%s242 + $0xf4] sm:$0xf] %vm232, %v305
        %338 = vst.msk [vmem:[%s242 + $0xf8] sm:$0xf] %vm232, %v306
        %v339 = vld [vmem:[#allocation2] sm:$0x8]
        %v340 = vld [vmem:[#allocation2 + $0x4] sm:$0xf]
        %v341 = vld [vmem:[#allocation2 + $0x8] sm:$0xf]
        %v342 = vld [vmem:[#allocation2 + $0x10] sm:$0x8]
        %v343 = vld [vmem:[#allocation2 + $0x14] sm:$0xf]
        %v344 = vld [vmem:[#allocation2 + $0x18] sm:$0xf]
        %v345 = vld [vmem:[#allocation2 + $0x20] sm:$0x8]
        %v346 = vld [vmem:[#allocation2 + $0x24] sm:$0xf]
        %v347 = vld [vmem:[#allocation2 + $0x28] sm:$0xf]
        %v348 = vld [vmem:[#allocation2 + $0x30] sm:$0x8]
        %v349 = vld [vmem:[#allocation2 + $0x34] sm:$0xf]
        %v350 = vld [vmem:[#allocation2 + $0x38] sm:$0xf]
        %v351 = vld [vmem:[#allocation2 + $0x40] sm:$0x8]
        %v352 = vld [vmem:[#allocation2 + $0x44] sm:$0xf]
        %v353 = vld [vmem:[#allocation2 + $0x48] sm:$0xf]
        %v354 = vld [vmem:[#allocation2 + $0x50] sm:$0x8]
        %v355 = vld [vmem:[#allocation2 + $0x54] sm:$0xf]
        %v356 = vld [vmem:[#allocation2 + $0x58] sm:$0xf]
        %v357 = vld [vmem:[#allocation2 + $0x60] sm:$0x8]
        %v358 = vld [vmem:[#allocation2 + $0x64] sm:$0xf]
        %v359 = vld [vmem:[#allocation2 + $0x68] sm:$0xf]
        %v360 = vld [vmem:[#allocation2 + $0x70] sm:$0x8]
        %v361 = vld [vmem:[#allocation2 + $0x74] sm:$0xf]
        %v362 = vld [vmem:[#allocation2 + $0x78] sm:$0xf]
        %v363 = vld [vmem:[#allocation2 + $0x80] sm:$0x8]
        %v364 = vld [vmem:[#allocation2 + $0x84] sm:$0xf]
        %v365 = vld [vmem:[#allocation2 + $0x88] sm:$0xf]
        %v366 = vld [vmem:[#allocation2 + $0x90] sm:$0x8]
        %v367 = vld [vmem:[#allocation2 + $0x94] sm:$0xf]
        %v368 = vld [vmem:[#allocation2 + $0x98] sm:$0xf]
        %v369 = vld [vmem:[#allocation2 + $0xa0] sm:$0x8]
        %v370 = vld [vmem:[#allocation2 + $0xa4] sm:$0xf]
        %v371 = vld [vmem:[#allocation2 + $0xa8] sm:$0xf]
        %v372 = vld [vmem:[#allocation2 + $0xb0] sm:$0x8]
        %v373 = vld [vmem:[#allocation2 + $0xb4] sm:$0xf]
        %v374 = vld [vmem:[#allocation2 + $0xb8] sm:$0xf]
        %v375 = vld [vmem:[#allocation2 + $0xc0] sm:$0x8]
        %v376 = vld [vmem:[#allocation2 + $0xc4] sm:$0xf]
        %v377 = vld [vmem:[#allocation2 + $0xc8] sm:$0xf]
        %v378 = vld [vmem:[#allocation2 + $0xd0] sm:$0x8]
        %v379 = vld [vmem:[#allocation2 + $0xd4] sm:$0xf]
        %v380 = vld [vmem:[#allocation2 + $0xd8] sm:$0xf]
        %v381 = vld [vmem:[#allocation2 + $0xe0] sm:$0x8]
        %v382 = vld [vmem:[#allocation2 + $0xe4] sm:$0xf]
        %v383 = vld [vmem:[#allocation2 + $0xe8] sm:$0xf]
        %v384 = vld [vmem:[#allocation2 + $0xf0] sm:$0x8]
        %v385 = vld [vmem:[#allocation2 + $0xf4] sm:$0xf]
        %v386 = vld [vmem:[#allocation2 + $0xf8] sm:$0xf]
        %v387 = vld [vmem:[#allocation2 + $0xc] sm:$0x1]
        %v388 = vld [vmem:[#allocation2 + $0x1c] sm:$0x1]
        %v389 = vld [vmem:[#allocation2 + $0x2c] sm:$0x1]
        %v390 = vld [vmem:[#allocation2 + $0x3c] sm:$0x1]
        %v391 = vld [vmem:[#allocation2 + $0x4c] sm:$0x1]
        %v392 = vld [vmem:[#allocation2 + $0x5c] sm:$0x1]
        %v393 = vld [vmem:[#allocation2 + $0x6c] sm:$0x1]
        %v394 = vld [vmem:[#allocation2 + $0x7c] sm:$0x1]
        %v395 = vld [vmem:[#allocation2 + $0x8c] sm:$0x1]
        %v396 = vld [vmem:[#allocation2 + $0x9c] sm:$0x1]
        %v397 = vld [vmem:[#allocation2 + $0xac] sm:$0x1]
        %v398 = vld [vmem:[#allocation2 + $0xbc] sm:$0x1]
        %v399 = vld [vmem:[#allocation2 + $0xcc] sm:$0x1]
        %v400 = vld [vmem:[#allocation2 + $0xdc] sm:$0x1]
        %v401 = vld [vmem:[#allocation2 + $0xec] sm:$0x1]
        %v402 = vld [vmem:[#allocation2 + $0xfc] sm:$0x1]
        %v403 = vld [vmem:[%s242] sm:$0x8]
        %v404 = vld [vmem:[%s242 + $0x4] sm:$0xf]
        %v405 = vld [vmem:[%s242 + $0x8] sm:$0xf]
        %v406 = vld [vmem:[%s242 + $0x10] sm:$0x8]
        %v407 = vld [vmem:[%s242 + $0x14] sm:$0xf]
        %v408 = vld [vmem:[%s242 + $0x18] sm:$0xf]
        %v409 = vld [vmem:[%s242 + $0x20] sm:$0x8]
        %v410 = vld [vmem:[%s242 + $0x24] sm:$0xf]
        %v411 = vld [vmem:[%s242 + $0x28] sm:$0xf]
        %v412 = vld [vmem:[%s242 + $0x30] sm:$0x8]
        %v413 = vld [vmem:[%s242 + $0x34] sm:$0xf]
        %v414 = vld [vmem:[%s242 + $0x38] sm:$0xf]
        %v415 = vld [vmem:[%s242 + $0x40] sm:$0x8]
        %v416 = vld [vmem:[%s242 + $0x44] sm:$0xf]
        %v417 = vld [vmem:[%s242 + $0x48] sm:$0xf]
        %v418 = vld [vmem:[%s242 + $0x50] sm:$0x8]
        %v419 = vld [vmem:[%s242 + $0x54] sm:$0xf]
        %v420 = vld [vmem:[%s242 + $0x58] sm:$0xf]
        %v421 = vld [vmem:[%s242 + $0x60] sm:$0x8]
        %v422 = vld [vmem:[%s242 + $0x64] sm:$0xf]
        %v423 = vld [vmem:[%s242 + $0x68] sm:$0xf]
        %v424 = vld [vmem:[%s242 + $0x70] sm:$0x8]
        %v425 = vld [vmem:[%s242 + $0x74] sm:$0xf]
        %v426 = vld [vmem:[%s242 + $0x78] sm:$0xf]
        %v427 = vld [vmem:[%s242 + $0x80] sm:$0x8]
        %v428 = vld [vmem:[%s242 + $0x84] sm:$0xf]
        %v429 = vld [vmem:[%s242 + $0x88] sm:$0xf]
        %v430 = vld [vmem:[%s242 + $0x90] sm:$0x8]
        %v431 = vld [vmem:[%s242 + $0x94] sm:$0xf]
        %v432 = vld [vmem:[%s242 + $0x98] sm:$0xf]
        %v433 = vld [vmem:[%s242 + $0xa0] sm:$0x8]
        %v434 = vld [vmem:[%s242 + $0xa4] sm:$0xf]
        %v435 = vld [vmem:[%s242 + $0xa8] sm:$0xf]
        %v436 = vld [vmem:[%s242 + $0xb0] sm:$0x8]
        %v437 = vld [vmem:[%s242 + $0xb4] sm:$0xf]
        %v438 = vld [vmem:[%s242 + $0xb8] sm:$0xf]
        %v439 = vld [vmem:[%s242 + $0xc0] sm:$0x8]
        %v440 = vld [vmem:[%s242 + $0xc4] sm:$0xf]
        %v441 = vld [vmem:[%s242 + $0xc8] sm:$0xf]
        %v442 = vld [vmem:[%s242 + $0xd0] sm:$0x8]
        %v443 = vld [vmem:[%s242 + $0xd4] sm:$0xf]
        %v444 = vld [vmem:[%s242 + $0xd8] sm:$0xf]
        %v445 = vld [vmem:[%s242 + $0xe0] sm:$0x8]
        %v446 = vld [vmem:[%s242 + $0xe4] sm:$0xf]
        %v447 = vld [vmem:[%s242 + $0xe8] sm:$0xf]
        %v448 = vld [vmem:[%s242 + $0xf0] sm:$0x8]
        %v449 = vld [vmem:[%s242 + $0xf4] sm:$0xf]
        %v450 = vld [vmem:[%s242 + $0xf8] sm:$0xf]
        %v451 = vld [vmem:[%s242 + $0xc] sm:$0x1]
        %v452 = vld [vmem:[%s242 + $0x1c] sm:$0x1]
        %v453 = vld [vmem:[%s242 + $0x2c] sm:$0x1]
        %v454 = vld [vmem:[%s242 + $0x3c] sm:$0x1]
        %v455 = vld [vmem:[%s242 + $0x4c] sm:$0x1]
        %v456 = vld [vmem:[%s242 + $0x5c] sm:$0x1]
        %v457 = vld [vmem:[%s242 + $0x6c] sm:$0x1]
        %v458 = vld [vmem:[%s242 + $0x7c] sm:$0x1]
        %v459 = vld [vmem:[%s242 + $0x8c] sm:$0x1]
        %v460 = vld [vmem:[%s242 + $0x9c] sm:$0x1]
        %v461 = vld [vmem:[%s242 + $0xac] sm:$0x1]
        %v462 = vld [vmem:[%s242 + $0xbc] sm:$0x1]
        %v463 = vld [vmem:[%s242 + $0xcc] sm:$0x1]
        %v464 = vld [vmem:[%s242 + $0xdc] sm:$0x1]
        %v465 = vld [vmem:[%s242 + $0xec] sm:$0x1]
        %v466 = vld [vmem:[%s242 + $0xfc] sm:$0x1]
        %s467 = scalar_lea.vmem [#allocation2], 32
        %v468 = vld [vmem:[%s467] sm:$0x8]
        %v469 = vld [vmem:[%s467 + $0x4] sm:$0xf]
        %v470 = vld [vmem:[%s467 + $0x8] sm:$0xf]
        %v471 = vld [vmem:[%s467 + $0x10] sm:$0x8]
        %v472 = vld [vmem:[%s467 + $0x14] sm:$0xf]
        %v473 = vld [vmem:[%s467 + $0x18] sm:$0xf]
        %v474 = vld [vmem:[%s467 + $0x20] sm:$0x8]
        %v475 = vld [vmem:[%s467 + $0x24] sm:$0xf]
        %v476 = vld [vmem:[%s467 + $0x28] sm:$0xf]
        %v477 = vld [vmem:[%s467 + $0x30] sm:$0x8]
        %v478 = vld [vmem:[%s467 + $0x34] sm:$0xf]
        %v479 = vld [vmem:[%s467 + $0x38] sm:$0xf]
        %v480 = vld [vmem:[%s467 + $0x40] sm:$0x8]
        %v481 = vld [vmem:[%s467 + $0x44] sm:$0xf]
        %v482 = vld [vmem:[%s467 + $0x48] sm:$0xf]
        %v483 = vld [vmem:[%s467 + $0x50] sm:$0x8]
        %v484 = vld [vmem:[%s467 + $0x54] sm:$0xf]
        %v485 = vld [vmem:[%s467 + $0x58] sm:$0xf]
        %v486 = vld [vmem:[%s467 + $0x60] sm:$0x8]
        %v487 = vld [vmem:[%s467 + $0x64] sm:$0xf]
        %v488 = vld [vmem:[%s467 + $0x68] sm:$0xf]
        %v489 = vld [vmem:[%s467 + $0x70] sm:$0x8]
        %v490 = vld [vmem:[%s467 + $0x74] sm:$0xf]
        %v491 = vld [vmem:[%s467 + $0x78] sm:$0xf]
        %v492 = vld [vmem:[%s467 + $0x80] sm:$0x8]
        %v493 = vld [vmem:[%s467 + $0x84] sm:$0xf]
        %v494 = vld [vmem:[%s467 + $0x88] sm:$0xf]
        %v495 = vld [vmem:[%s467 + $0x90] sm:$0x8]
        %v496 = vld [vmem:[%s467 + $0x94] sm:$0xf]
        %v497 = vld [vmem:[%s467 + $0x98] sm:$0xf]
        %v498 = vld [vmem:[%s467 + $0xa0] sm:$0x8]
        %v499 = vld [vmem:[%s467 + $0xa4] sm:$0xf]
        %v500 = vld [vmem:[%s467 + $0xa8] sm:$0xf]
        %v501 = vld [vmem:[%s467 + $0xb0] sm:$0x8]
        %v502 = vld [vmem:[%s467 + $0xb4] sm:$0xf]
        %v503 = vld [vmem:[%s467 + $0xb8] sm:$0xf]
        %v504 = vld [vmem:[%s467 + $0xc0] sm:$0x8]
        %v505 = vld [vmem:[%s467 + $0xc4] sm:$0xf]
        %v506 = vld [vmem:[%s467 + $0xc8] sm:$0xf]
        %v507 = vld [vmem:[%s467 + $0xd0] sm:$0x8]
        %v508 = vld [vmem:[%s467 + $0xd4] sm:$0xf]
        %v509 = vld [vmem:[%s467 + $0xd8] sm:$0xf]
        %v510 = vld [vmem:[%s467 + $0xe0] sm:$0x8]
        %v511 = vld [vmem:[%s467 + $0xe4] sm:$0xf]
        %v512 = vld [vmem:[%s467 + $0xe8] sm:$0xf]
        %v513 = vld [vmem:[%s467 + $0xf0] sm:$0x8]
        %v514 = vld [vmem:[%s467 + $0xf4] sm:$0xf]
        %v515 = vld [vmem:[%s467 + $0xf8] sm:$0xf]
        %v516 = vld [vmem:[%s467 + $0xc] sm:$0x1]
        %v517 = vld [vmem:[%s467 + $0x1c] sm:$0x1]
        %v518 = vld [vmem:[%s467 + $0x2c] sm:$0x1]
        %v519 = vld [vmem:[%s467 + $0x3c] sm:$0x1]
        %v520 = vld [vmem:[%s467 + $0x4c] sm:$0x1]
        %v521 = vld [vmem:[%s467 + $0x5c] sm:$0x1]
        %v522 = vld [vmem:[%s467 + $0x6c] sm:$0x1]
        %v523 = vld [vmem:[%s467 + $0x7c] sm:$0x1]
        %v524 = vld [vmem:[%s467 + $0x8c] sm:$0x1]
        %v525 = vld [vmem:[%s467 + $0x9c] sm:$0x1]
        %v526 = vld [vmem:[%s467 + $0xac] sm:$0x1]
        %v527 = vld [vmem:[%s467 + $0xbc] sm:$0x1]
        %v528 = vld [vmem:[%s467 + $0xcc] sm:$0x1]
        %v529 = vld [vmem:[%s467 + $0xdc] sm:$0x1]
        %v530 = vld [vmem:[%s467 + $0xec] sm:$0x1]
        %v531 = vld [vmem:[%s467 + $0xfc] sm:$0x1]
        %v580 = vunpack.c.l.b16 %v339
        %v581 = vunpack.c.l.b16 %v340
        %v582 = vunpack.c.l.b16 %v341
        %v583 = vunpack.c.l.b16 %v342
        %v584 = vunpack.c.l.b16 %v343
        %v585 = vunpack.c.l.b16 %v344
        %v586 = vunpack.c.l.b16 %v345
        %v587 = vunpack.c.l.b16 %v346
        %v588 = vunpack.c.l.b16 %v347
        %v589 = vunpack.c.l.b16 %v348
        %v590 = vunpack.c.l.b16 %v349
        %v591 = vunpack.c.l.b16 %v350
        %v592 = vunpack.c.l.b16 %v351
        %v593 = vunpack.c.l.b16 %v352
        %v594 = vunpack.c.l.b16 %v353
        %v595 = vunpack.c.l.b16 %v354
        %v596 = vunpack.c.l.b16 %v355
        %v597 = vunpack.c.l.b16 %v356
        %v598 = vunpack.c.l.b16 %v357
        %v599 = vunpack.c.l.b16 %v358
        %v600 = vunpack.c.l.b16 %v359
        %v601 = vunpack.c.l.b16 %v360
        %v602 = vunpack.c.l.b16 %v361
        %v603 = vunpack.c.l.b16 %v362
        %v604 = vunpack.c.l.b16 %v363
        %v605 = vunpack.c.l.b16 %v364
        %v606 = vunpack.c.l.b16 %v365
        %v607 = vunpack.c.l.b16 %v366
        %v608 = vunpack.c.l.b16 %v367
        %v609 = vunpack.c.l.b16 %v368
        %v610 = vunpack.c.l.b16 %v369
        %v611 = vunpack.c.l.b16 %v370
        %v612 = vunpack.c.l.b16 %v371
        %v613 = vunpack.c.l.b16 %v372
        %v614 = vunpack.c.l.b16 %v373
        %v615 = vunpack.c.l.b16 %v374
        %v616 = vunpack.c.l.b16 %v375
        %v617 = vunpack.c.l.b16 %v376
        %v618 = vunpack.c.l.b16 %v377
        %v619 = vunpack.c.l.b16 %v378
        %v620 = vunpack.c.l.b16 %v379
        %v621 = vunpack.c.l.b16 %v380
        %v622 = vunpack.c.l.b16 %v381
        %v623 = vunpack.c.l.b16 %v382
        %v624 = vunpack.c.l.b16 %v383
        %v625 = vunpack.c.l.b16 %v384
        %v626 = vunpack.c.l.b16 %v385
        %v627 = vunpack.c.l.b16 %v386
        %v628 = vpack.c.b16 %v581, %v580
        %v629 = vpack.c.b16 %v582, %v582
        %v630 = vpack.c.b16 %v584, %v583
        %v631 = vpack.c.b16 %v585, %v585
        %v632 = vpack.c.b16 %v587, %v586
        %v633 = vpack.c.b16 %v588, %v588
        %v634 = vpack.c.b16 %v590, %v589
        %v635 = vpack.c.b16 %v591, %v591
        %v636 = vpack.c.b16 %v593, %v592
        %v637 = vpack.c.b16 %v594, %v594
        %v638 = vpack.c.b16 %v596, %v595
        %v639 = vpack.c.b16 %v597, %v597
        %v640 = vpack.c.b16 %v599, %v598
        %v641 = vpack.c.b16 %v600, %v600
        %v642 = vpack.c.b16 %v602, %v601
        %v643 = vpack.c.b16 %v603, %v603
        %v644 = vpack.c.b16 %v605, %v604
        %v645 = vpack.c.b16 %v606, %v606
        %v646 = vpack.c.b16 %v608, %v607
        %v647 = vpack.c.b16 %v609, %v609
        %v648 = vpack.c.b16 %v611, %v610
        %v649 = vpack.c.b16 %v612, %v612
        %v650 = vpack.c.b16 %v614, %v613
        %v651 = vpack.c.b16 %v615, %v615
        %v652 = vpack.c.b16 %v617, %v616
        %v653 = vpack.c.b16 %v618, %v618
        %v654 = vpack.c.b16 %v620, %v619
        %v655 = vpack.c.b16 %v621, %v621
        %v656 = vpack.c.b16 %v623, %v622
        %v657 = vpack.c.b16 %v624, %v624
        %v658 = vpack.c.b16 %v626, %v625
        %v659 = vpack.c.b16 %v627, %v627
        %v660 = vpack.c.b16 %v582, %v581
        %v661 = vpack.c.b16 %v585, %v584
        %v662 = vpack.c.b16 %v588, %v587
        %v663 = vpack.c.b16 %v591, %v590
        %v664 = vpack.c.b16 %v594, %v593
        %v665 = vpack.c.b16 %v597, %v596
        %v666 = vpack.c.b16 %v600, %v599
        %v667 = vpack.c.b16 %v603, %v602
        %v668 = vpack.c.b16 %v606, %v605
        %v669 = vpack.c.b16 %v609, %v608
        %v670 = vpack.c.b16 %v612, %v611
        %v671 = vpack.c.b16 %v615, %v614
        %v672 = vpack.c.b16 %v618, %v617
        %v673 = vpack.c.b16 %v621, %v620
        %v674 = vpack.c.b16 %v624, %v623
        %v675 = vpack.c.b16 %v627, %v626
        %v677 = vshrl.u32 %v660, 16
        %v679 = vrot.slane %v677, 4
        %v680 = vshll.u32 %v660, 16
        %v682 = vrot.slane %v680, 5
        %v683 = vor.u32 %v679, %v682
        %v685 = vshrl.u32 %v661, 16
        %v687 = vrot.slane %v685, 4
        %v688 = vshll.u32 %v661, 16
        %v690 = vrot.slane %v688, 5
        %v691 = vor.u32 %v687, %v690
        %v693 = vshrl.u32 %v662, 16
        %v695 = vrot.slane %v693, 4
        %v696 = vshll.u32 %v662, 16
        %v698 = vrot.slane %v696, 5
        %v699 = vor.u32 %v695, %v698
        %v701 = vshrl.u32 %v663, 16
        %v703 = vrot.slane %v701, 4
        %v704 = vshll.u32 %v663, 16
        %v706 = vrot.slane %v704, 5
        %v707 = vor.u32 %v703, %v706
        %v709 = vshrl.u32 %v664, 16
        %v711 = vrot.slane %v709, 4
        %v712 = vshll.u32 %v664, 16
        %v714 = vrot.slane %v712, 5
        %v715 = vor.u32 %v711, %v714
        %v717 = vshrl.u32 %v665, 16
        %v719 = vrot.slane %v717, 4
        %v720 = vshll.u32 %v665, 16
        %v722 = vrot.slane %v720, 5
        %v723 = vor.u32 %v719, %v722
        %v725 = vshrl.u32 %v666, 16
        %v727 = vrot.slane %v725, 4
        %v728 = vshll.u32 %v666, 16
        %v730 = vrot.slane %v728, 5
        %v731 = vor.u32 %v727, %v730
        %v733 = vshrl.u32 %v667, 16
        %v735 = vrot.slane %v733, 4
        %v736 = vshll.u32 %v667, 16
        %v738 = vrot.slane %v736, 5
        %v739 = vor.u32 %v735, %v738
        %v741 = vshrl.u32 %v668, 16
        %v743 = vrot.slane %v741, 4
        %v744 = vshll.u32 %v668, 16
        %v746 = vrot.slane %v744, 5
        %v747 = vor.u32 %v743, %v746
        %v749 = vshrl.u32 %v669, 16
        %v751 = vrot.slane %v749, 4
        %v752 = vshll.u32 %v669, 16
        %v754 = vrot.slane %v752, 5
        %v755 = vor.u32 %v751, %v754
        %v757 = vshrl.u32 %v670, 16
        %v759 = vrot.slane %v757, 4
        %v760 = vshll.u32 %v670, 16
        %v762 = vrot.slane %v760, 5
        %v763 = vor.u32 %v759, %v762
        %v765 = vshrl.u32 %v671, 16
        %v767 = vrot.slane %v765, 4
        %v768 = vshll.u32 %v671, 16
        %v770 = vrot.slane %v768, 5
        %v771 = vor.u32 %v767, %v770
        %v773 = vshrl.u32 %v672, 16
        %v775 = vrot.slane %v773, 4
        %v776 = vshll.u32 %v672, 16
        %v778 = vrot.slane %v776, 5
        %v779 = vor.u32 %v775, %v778
        %v781 = vshrl.u32 %v673, 16
        %v783 = vrot.slane %v781, 4
        %v784 = vshll.u32 %v673, 16
        %v786 = vrot.slane %v784, 5
        %v787 = vor.u32 %v783, %v786
        %v789 = vshrl.u32 %v674, 16
        %v791 = vrot.slane %v789, 4
        %v792 = vshll.u32 %v674, 16
        %v794 = vrot.slane %v792, 5
        %v795 = vor.u32 %v791, %v794
        %v797 = vshrl.u32 %v675, 16
        %v799 = vrot.slane %v797, 4
        %v800 = vshll.u32 %v675, 16
        %v802 = vrot.slane %v800, 5
        %v803 = vor.u32 %v799, %v802
        %804 = vrot.lane.b32.xlu0 %v683, 4
        %v805 = vpop.permute.xlu0 %804
        %806 = vrot.lane.b32.xlu0 %v691, 4
        %v807 = vpop.permute.xlu0 %806
        %808 = vrot.lane.b32.xlu0 %v699, 4
        %v809 = vpop.permute.xlu0 %808
        %810 = vrot.lane.b32.xlu0 %v707, 4
        %v811 = vpop.permute.xlu0 %810
        %812 = vrot.lane.b32.xlu0 %v715, 4
        %v813 = vpop.permute.xlu0 %812
        %814 = vrot.lane.b32.xlu0 %v723, 4
        %v815 = vpop.permute.xlu0 %814
        %816 = vrot.lane.b32.xlu0 %v731, 4
        %v817 = vpop.permute.xlu0 %816
        %818 = vrot.lane.b32.xlu0 %v739, 4
        %v819 = vpop.permute.xlu0 %818
        %820 = vrot.lane.b32.xlu0 %v747, 4
        %v821 = vpop.permute.xlu0 %820
        %822 = vrot.lane.b32.xlu0 %v755, 4
        %v823 = vpop.permute.xlu0 %822
        %824 = vrot.lane.b32.xlu0 %v763, 4
        %v825 = vpop.permute.xlu0 %824
        %826 = vrot.lane.b32.xlu0 %v771, 4
        %v827 = vpop.permute.xlu0 %826
        %828 = vrot.lane.b32.xlu0 %v779, 4
        %v829 = vpop.permute.xlu0 %828
        %830 = vrot.lane.b32.xlu0 %v787, 4
        %v831 = vpop.permute.xlu0 %830
        %832 = vrot.lane.b32.xlu0 %v795, 4
        %v833 = vpop.permute.xlu0 %832
        %834 = vrot.lane.b32.xlu0 %v803, 4
        %v835 = vpop.permute.xlu0 %834
        %v852 = vunpack.c.l.b16 %v387
        %v853 = vunpack.c.l.b16 %v388
        %v854 = vunpack.c.l.b16 %v389
        %v855 = vunpack.c.l.b16 %v390
        %v856 = vunpack.c.l.b16 %v391
        %v857 = vunpack.c.l.b16 %v392
        %v858 = vunpack.c.l.b16 %v393
        %v859 = vunpack.c.l.b16 %v394
        %v860 = vunpack.c.l.b16 %v395
        %v861 = vunpack.c.l.b16 %v396
        %v862 = vunpack.c.l.b16 %v397
        %v863 = vunpack.c.l.b16 %v398
        %v864 = vunpack.c.l.b16 %v399
        %v865 = vunpack.c.l.b16 %v400
        %v866 = vunpack.c.l.b16 %v401
        %v867 = vunpack.c.l.b16 %v402
        %v868 = vpack.c.b16 %v852, %v852
        %v869 = vpack.c.b16 %v853, %v853
        %v870 = vpack.c.b16 %v854, %v854
        %v871 = vpack.c.b16 %v855, %v855
        %v872 = vpack.c.b16 %v856, %v856
        %v873 = vpack.c.b16 %v857, %v857
        %v874 = vpack.c.b16 %v858, %v858
        %v875 = vpack.c.b16 %v859, %v859
        %v876 = vpack.c.b16 %v860, %v860
        %v877 = vpack.c.b16 %v861, %v861
        %v878 = vpack.c.b16 %v862, %v862
        %v879 = vpack.c.b16 %v863, %v863
        %v880 = vpack.c.b16 %v864, %v864
        %v881 = vpack.c.b16 %v865, %v865
        %v882 = vpack.c.b16 %v866, %v866
        %v883 = vpack.c.b16 %v867, %v867
        %vm884 = vcmask 1042432
        %v885 = vrot.slane %v660, 5
        %v886 = vrot.slane %v868, 5
        %v887 = vsel %vm884, %v885, %v886
        %v888 = vrot.slane %v661, 5
        %v889 = vrot.slane %v869, 5
        %v890 = vsel %vm884, %v888, %v889
        %v891 = vrot.slane %v662, 5
        %v892 = vrot.slane %v870, 5
        %v893 = vsel %vm884, %v891, %v892
        %v894 = vrot.slane %v663, 5
        %v895 = vrot.slane %v871, 5
        %v896 = vsel %vm884, %v894, %v895
        %v897 = vrot.slane %v664, 5
        %v898 = vrot.slane %v872, 5
        %v899 = vsel %vm884, %v897, %v898
        %v900 = vrot.slane %v665, 5
        %v901 = vrot.slane %v873, 5
        %v902 = vsel %vm884, %v900, %v901
        %v903 = vrot.slane %v666, 5
        %v904 = vrot.slane %v874, 5
        %v905 = vsel %vm884, %v903, %v904
        %v906 = vrot.slane %v667, 5
        %v907 = vrot.slane %v875, 5
        %v908 = vsel %vm884, %v906, %v907
        %v909 = vrot.slane %v668, 5
        %v910 = vrot.slane %v876, 5
        %v911 = vsel %vm884, %v909, %v910
        %v912 = vrot.slane %v669, 5
        %v913 = vrot.slane %v877, 5
        %v914 = vsel %vm884, %v912, %v913
        %v915 = vrot.slane %v670, 5
        %v916 = vrot.slane %v878, 5
        %v917 = vsel %vm884, %v915, %v916
        %v918 = vrot.slane %v671, 5
        %v919 = vrot.slane %v879, 5
        %v920 = vsel %vm884, %v918, %v919
        %v921 = vrot.slane %v672, 5
        %v922 = vrot.slane %v880, 5
        %v923 = vsel %vm884, %v921, %v922
        %v924 = vrot.slane %v673, 5
        %v925 = vrot.slane %v881, 5
        %v926 = vsel %vm884, %v924, %v925
        %v927 = vrot.slane %v674, 5
        %v928 = vrot.slane %v882, 5
        %v929 = vsel %vm884, %v927, %v928
        %v930 = vrot.slane %v675, 5
        %v931 = vrot.slane %v883, 5
        %v932 = vsel %vm884, %v930, %v931
        %933 = vrot.lane.b32.xlu0 %v885, 8
        %v934 = vpop.permute.xlu0 %933
        %935 = vrot.lane.b32.xlu0 %v887, 8
        %v936 = vpop.permute.xlu0 %935
        %937 = vrot.lane.b32.xlu0 %v888, 8
        %v938 = vpop.permute.xlu0 %937
        %939 = vrot.lane.b32.xlu0 %v890, 8
        %v940 = vpop.permute.xlu0 %939
        %941 = vrot.lane.b32.xlu0 %v891, 8
        %v942 = vpop.permute.xlu0 %941
        %943 = vrot.lane.b32.xlu0 %v893, 8
        %v944 = vpop.permute.xlu0 %943
        %945 = vrot.lane.b32.xlu0 %v894, 8
        %v946 = vpop.permute.xlu0 %945
        %947 = vrot.lane.b32.xlu0 %v896, 8
        %v948 = vpop.permute.xlu0 %947
        %949 = vrot.lane.b32.xlu0 %v897, 8
        %v950 = vpop.permute.xlu0 %949
        %951 = vrot.lane.b32.xlu0 %v899, 8
        %v952 = vpop.permute.xlu0 %951
        %953 = vrot.lane.b32.xlu0 %v900, 8
        %v954 = vpop.permute.xlu0 %953
        %955 = vrot.lane.b32.xlu0 %v902, 8
        %v956 = vpop.permute.xlu0 %955
        %957 = vrot.lane.b32.xlu0 %v903, 8
        %v958 = vpop.permute.xlu0 %957
        %959 = vrot.lane.b32.xlu0 %v905, 8
        %v960 = vpop.permute.xlu0 %959
        %961 = vrot.lane.b32.xlu0 %v906, 8
        %v962 = vpop.permute.xlu0 %961
        %963 = vrot.lane.b32.xlu0 %v908, 8
        %v964 = vpop.permute.xlu0 %963
        %965 = vrot.lane.b32.xlu0 %v909, 8
        %v966 = vpop.permute.xlu0 %965
        %967 = vrot.lane.b32.xlu0 %v911, 8
        %v968 = vpop.permute.xlu0 %967
        %969 = vrot.lane.b32.xlu0 %v912, 8
        %v970 = vpop.permute.xlu0 %969
        %971 = vrot.lane.b32.xlu0 %v914, 8
        %v972 = vpop.permute.xlu0 %971
        %973 = vrot.lane.b32.xlu0 %v915, 8
        %v974 = vpop.permute.xlu0 %973
        %975 = vrot.lane.b32.xlu0 %v917, 8
        %v976 = vpop.permute.xlu0 %975
        %977 = vrot.lane.b32.xlu0 %v918, 8
        %v978 = vpop.permute.xlu0 %977
        %979 = vrot.lane.b32.xlu0 %v920, 8
        %v980 = vpop.permute.xlu0 %979
        %981 = vrot.lane.b32.xlu0 %v921, 8
        %v982 = vpop.permute.xlu0 %981
        %983 = vrot.lane.b32.xlu0 %v923, 8
        %v984 = vpop.permute.xlu0 %983
        %985 = vrot.lane.b32.xlu0 %v924, 8
        %v986 = vpop.permute.xlu0 %985
        %987 = vrot.lane.b32.xlu0 %v926, 8
        %v988 = vpop.permute.xlu0 %987
        %989 = vrot.lane.b32.xlu0 %v927, 8
        %v990 = vpop.permute.xlu0 %989
        %991 = vrot.lane.b32.xlu0 %v929, 8
        %v992 = vpop.permute.xlu0 %991
        %993 = vrot.lane.b32.xlu0 %v930, 8
        %v994 = vpop.permute.xlu0 %993
        %995 = vrot.lane.b32.xlu0 %v932, 8
        %v996 = vpop.permute.xlu0 %995
        %v1045 = vunpack.c.l.b16 %v403
        %v1046 = vunpack.c.l.b16 %v404
        %v1047 = vunpack.c.l.b16 %v405
        %v1048 = vunpack.c.l.b16 %v406
        %v1049 = vunpack.c.l.b16 %v407
        %v1050 = vunpack.c.l.b16 %v408
        %v1051 = vunpack.c.l.b16 %v409
        %v1052 = vunpack.c.l.b16 %v410
        %v1053 = vunpack.c.l.b16 %v411
        %v1054 = vunpack.c.l.b16 %v412
        %v1055 = vunpack.c.l.b16 %v413
        %v1056 = vunpack.c.l.b16 %v414
        %v1057 = vunpack.c.l.b16 %v415
        %v1058 = vunpack.c.l.b16 %v416
        %v1059 = vunpack.c.l.b16 %v417
        %v1060 = vunpack.c.l.b16 %v418
        %v1061 = vunpack.c.l.b16 %v419
        %v1062 = vunpack.c.l.b16 %v420
        %v1063 = vunpack.c.l.b16 %v421
        %v1064 = vunpack.c.l.b16 %v422
        %v1065 = vunpack.c.l.b16 %v423
        %v1066 = vunpack.c.l.b16 %v424
        %v1067 = vunpack.c.l.b16 %v425
        %v1068 = vunpack.c.l.b16 %v426
        %v1069 = vunpack.c.l.b16 %v427
        %v1070 = vunpack.c.l.b16 %v428
        %v1071 = vunpack.c.l.b16 %v429
        %v1072 = vunpack.c.l.b16 %v430
        %v1073 = vunpack.c.l.b16 %v431
        %v1074 = vunpack.c.l.b16 %v432
        %v1075 = vunpack.c.l.b16 %v433
        %v1076 = vunpack.c.l.b16 %v434
        %v1077 = vunpack.c.l.b16 %v435
        %v1078 = vunpack.c.l.b16 %v436
        %v1079 = vunpack.c.l.b16 %v437
        %v1080 = vunpack.c.l.b16 %v438
        %v1081 = vunpack.c.l.b16 %v439
        %v1082 = vunpack.c.l.b16 %v440
        %v1083 = vunpack.c.l.b16 %v441
        %v1084 = vunpack.c.l.b16 %v442
        %v1085 = vunpack.c.l.b16 %v443
        %v1086 = vunpack.c.l.b16 %v444
        %v1087 = vunpack.c.l.b16 %v445
        %v1088 = vunpack.c.l.b16 %v446
        %v1089 = vunpack.c.l.b16 %v447
        %v1090 = vunpack.c.l.b16 %v448
        %v1091 = vunpack.c.l.b16 %v449
        %v1092 = vunpack.c.l.b16 %v450
        %v1093 = vpack.c.b16 %v1046, %v1045
        %v1094 = vpack.c.b16 %v1047, %v1047
        %v1095 = vpack.c.b16 %v1049, %v1048
        %v1096 = vpack.c.b16 %v1050, %v1050
        %v1097 = vpack.c.b16 %v1052, %v1051
        %v1098 = vpack.c.b16 %v1053, %v1053
        %v1099 = vpack.c.b16 %v1055, %v1054
        %v1100 = vpack.c.b16 %v1056, %v1056
        %v1101 = vpack.c.b16 %v1058, %v1057
        %v1102 = vpack.c.b16 %v1059, %v1059
        %v1103 = vpack.c.b16 %v1061, %v1060
        %v1104 = vpack.c.b16 %v1062, %v1062
        %v1105 = vpack.c.b16 %v1064, %v1063
        %v1106 = vpack.c.b16 %v1065, %v1065
        %v1107 = vpack.c.b16 %v1067, %v1066
        %v1108 = vpack.c.b16 %v1068, %v1068
        %v1109 = vpack.c.b16 %v1070, %v1069
        %v1110 = vpack.c.b16 %v1071, %v1071
        %v1111 = vpack.c.b16 %v1073, %v1072
        %v1112 = vpack.c.b16 %v1074, %v1074
        %v1113 = vpack.c.b16 %v1076, %v1075
        %v1114 = vpack.c.b16 %v1077, %v1077
        %v1115 = vpack.c.b16 %v1079, %v1078
        %v1116 = vpack.c.b16 %v1080, %v1080
        %v1117 = vpack.c.b16 %v1082, %v1081
        %v1118 = vpack.c.b16 %v1083, %v1083
        %v1119 = vpack.c.b16 %v1085, %v1084
        %v1120 = vpack.c.b16 %v1086, %v1086
        %v1121 = vpack.c.b16 %v1088, %v1087
        %v1122 = vpack.c.b16 %v1089, %v1089
        %v1123 = vpack.c.b16 %v1091, %v1090
        %v1124 = vpack.c.b16 %v1092, %v1092
        %1125 = vrot.lane.b32.xlu0 %v1093, 12
        %v1126 = vpop.permute.xlu0 %1125
        %1127 = vrot.lane.b32.xlu0 %v1094, 12
        %v1128 = vpop.permute.xlu0 %1127
        %1129 = vrot.lane.b32.xlu0 %v1095, 12
        %v1130 = vpop.permute.xlu0 %1129
        %1131 = vrot.lane.b32.xlu0 %v1096, 12
        %v1132 = vpop.permute.xlu0 %1131
        %1133 = vrot.lane.b32.xlu0 %v1097, 12
        %v1134 = vpop.permute.xlu0 %1133
        %1135 = vrot.lane.b32.xlu0 %v1098, 12
        %v1136 = vpop.permute.xlu0 %1135
        %1137 = vrot.lane.b32.xlu0 %v1099, 12
        %v1138 = vpop.permute.xlu0 %1137
        %1139 = vrot.lane.b32.xlu0 %v1100, 12
        %v1140 = vpop.permute.xlu0 %1139
        %1141 = vrot.lane.b32.xlu0 %v1101, 12
        %v1142 = vpop.permute.xlu0 %1141
        %1143 = vrot.lane.b32.xlu0 %v1102, 12
        %v1144 = vpop.permute.xlu0 %1143
        %1145 = vrot.lane.b32.xlu0 %v1103, 12
        %v1146 = vpop.permute.xlu0 %1145
        %1147 = vrot.lane.b32.xlu0 %v1104, 12
        %v1148 = vpop.permute.xlu0 %1147
        %1149 = vrot.lane.b32.xlu0 %v1105, 12
        %v1150 = vpop.permute.xlu0 %1149
        %1151 = vrot.lane.b32.xlu0 %v1106, 12
        %v1152 = vpop.permute.xlu0 %1151
        %1153 = vrot.lane.b32.xlu0 %v1107, 12
        %v1154 = vpop.permute.xlu0 %1153
        %1155 = vrot.lane.b32.xlu0 %v1108, 12
        %v1156 = vpop.permute.xlu0 %1155
        %1157 = vrot.lane.b32.xlu0 %v1109, 12
        %v1158 = vpop.permute.xlu0 %1157
        %1159 = vrot.lane.b32.xlu0 %v1110, 12
        %v1160 = vpop.permute.xlu0 %1159
        %1161 = vrot.lane.b32.xlu0 %v1111, 12
        %v1162 = vpop.permute.xlu0 %1161
        %1163 = vrot.lane.b32.xlu0 %v1112, 12
        %v1164 = vpop.permute.xlu0 %1163
        %1165 = vrot.lane.b32.xlu0 %v1113, 12
        %v1166 = vpop.permute.xlu0 %1165
        %1167 = vrot.lane.b32.xlu0 %v1114, 12
        %v1168 = vpop.permute.xlu0 %1167
        %1169 = vrot.lane.b32.xlu0 %v1115, 12
        %v1170 = vpop.permute.xlu0 %1169
        %1171 = vrot.lane.b32.xlu0 %v1116, 12
        %v1172 = vpop.permute.xlu0 %1171
        %1173 = vrot.lane.b32.xlu0 %v1117, 12
        %v1174 = vpop.permute.xlu0 %1173
        %1175 = vrot.lane.b32.xlu0 %v1118, 12
        %v1176 = vpop.permute.xlu0 %1175
        %1177 = vrot.lane.b32.xlu0 %v1119, 12
        %v1178 = vpop.permute.xlu0 %1177
        %1179 = vrot.lane.b32.xlu0 %v1120, 12
        %v1180 = vpop.permute.xlu0 %1179
        %1181 = vrot.lane.b32.xlu0 %v1121, 12
        %v1182 = vpop.permute.xlu0 %1181
        %1183 = vrot.lane.b32.xlu0 %v1122, 12
        %v1184 = vpop.permute.xlu0 %1183
        %1185 = vrot.lane.b32.xlu0 %v1123, 12
        %v1186 = vpop.permute.xlu0 %1185
        %1187 = vrot.lane.b32.xlu0 %v1124, 12
        %v1188 = vpop.permute.xlu0 %1187
        %v1189 = vpack.c.b16 %v1047, %v1046
        %v1190 = vpack.c.b16 %v1050, %v1049
        %v1191 = vpack.c.b16 %v1053, %v1052
        %v1192 = vpack.c.b16 %v1056, %v1055
        %v1193 = vpack.c.b16 %v1059, %v1058
        %v1194 = vpack.c.b16 %v1062, %v1061
        %v1195 = vpack.c.b16 %v1065, %v1064
        %v1196 = vpack.c.b16 %v1068, %v1067
        %v1197 = vpack.c.b16 %v1071, %v1070
        %v1198 = vpack.c.b16 %v1074, %v1073
        %v1199 = vpack.c.b16 %v1077, %v1076
        %v1200 = vpack.c.b16 %v1080, %v1079
        %v1201 = vpack.c.b16 %v1083, %v1082
        %v1202 = vpack.c.b16 %v1086, %v1085
        %v1203 = vpack.c.b16 %v1089, %v1088
        %v1204 = vpack.c.b16 %v1092, %v1091
        %v1206 = vshrl.u32 %v1189, 16
        %v1208 = vrot.slane %v1206, 4
        %v1209 = vshll.u32 %v1189, 16
        %v1211 = vrot.slane %v1209, 5
        %v1212 = vor.u32 %v1208, %v1211
        %v1214 = vshrl.u32 %v1190, 16
        %v1216 = vrot.slane %v1214, 4
        %v1217 = vshll.u32 %v1190, 16
        %v1219 = vrot.slane %v1217, 5
        %v1220 = vor.u32 %v1216, %v1219
        %v1222 = vshrl.u32 %v1191, 16
        %v1224 = vrot.slane %v1222, 4
        %v1225 = vshll.u32 %v1191, 16
        %v1227 = vrot.slane %v1225, 5
        %v1228 = vor.u32 %v1224, %v1227
        %v1230 = vshrl.u32 %v1192, 16
        %v1232 = vrot.slane %v1230, 4
        %v1233 = vshll.u32 %v1192, 16
        %v1235 = vrot.slane %v1233, 5
        %v1236 = vor.u32 %v1232, %v1235
        %v1238 = vshrl.u32 %v1193, 16
        %v1240 = vrot.slane %v1238, 4
        %v1241 = vshll.u32 %v1193, 16
        %v1243 = vrot.slane %v1241, 5
        %v1244 = vor.u32 %v1240, %v1243
        %v1246 = vshrl.u32 %v1194, 16
        %v1248 = vrot.slane %v1246, 4
        %v1249 = vshll.u32 %v1194, 16
        %v1251 = vrot.slane %v1249, 5
        %v1252 = vor.u32 %v1248, %v1251
        %v1254 = vshrl.u32 %v1195, 16
        %v1256 = vrot.slane %v1254, 4
        %v1257 = vshll.u32 %v1195, 16
        %v1259 = vrot.slane %v1257, 5
        %v1260 = vor.u32 %v1256, %v1259
        %v1262 = vshrl.u32 %v1196, 16
        %v1264 = vrot.slane %v1262, 4
        %v1265 = vshll.u32 %v1196, 16
        %v1267 = vrot.slane %v1265, 5
        %v1268 = vor.u32 %v1264, %v1267
        %v1270 = vshrl.u32 %v1197, 16
        %v1272 = vrot.slane %v1270, 4
        %v1273 = vshll.u32 %v1197, 16
        %v1275 = vrot.slane %v1273, 5
        %v1276 = vor.u32 %v1272, %v1275
        %v1278 = vshrl.u32 %v1198, 16
        %v1280 = vrot.slane %v1278, 4
        %v1281 = vshll.u32 %v1198, 16
        %v1283 = vrot.slane %v1281, 5
        %v1284 = vor.u32 %v1280, %v1283
        %v1286 = vshrl.u32 %v1199, 16
        %v1288 = vrot.slane %v1286, 4
        %v1289 = vshll.u32 %v1199, 16
        %v1291 = vrot.slane %v1289, 5
        %v1292 = vor.u32 %v1288, %v1291
        %v1294 = vshrl.u32 %v1200, 16
        %v1296 = vrot.slane %v1294, 4
        %v1297 = vshll.u32 %v1200, 16
        %v1299 = vrot.slane %v1297, 5
        %v1300 = vor.u32 %v1296, %v1299
        %v1302 = vshrl.u32 %v1201, 16
        %v1304 = vrot.slane %v1302, 4
        %v1305 = vshll.u32 %v1201, 16
        %v1307 = vrot.slane %v1305, 5
        %v1308 = vor.u32 %v1304, %v1307
        %v1310 = vshrl.u32 %v1202, 16
        %v1312 = vrot.slane %v1310, 4
        %v1313 = vshll.u32 %v1202, 16
        %v1315 = vrot.slane %v1313, 5
        %v1316 = vor.u32 %v1312, %v1315
        %v1318 = vshrl.u32 %v1203, 16
        %v1320 = vrot.slane %v1318, 4
        %v1321 = vshll.u32 %v1203, 16
        %v1323 = vrot.slane %v1321, 5
        %v1324 = vor.u32 %v1320, %v1323
        %v1326 = vshrl.u32 %v1204, 16
        %v1328 = vrot.slane %v1326, 4
        %v1329 = vshll.u32 %v1204, 16
        %v1331 = vrot.slane %v1329, 5
        %v1332 = vor.u32 %v1328, %v1331
        %1333 = vrot.lane.b32.xlu0 %v1212, 16
        %v1334 = vpop.permute.xlu0 %1333
        %1335 = vrot.lane.b32.xlu0 %v1220, 16
        %v1336 = vpop.permute.xlu0 %1335
        %1337 = vrot.lane.b32.xlu0 %v1228, 16
        %v1338 = vpop.permute.xlu0 %1337
        %1339 = vrot.lane.b32.xlu0 %v1236, 16
        %v1340 = vpop.permute.xlu0 %1339
        %1341 = vrot.lane.b32.xlu0 %v1244, 16
        %v1342 = vpop.permute.xlu0 %1341
        %1343 = vrot.lane.b32.xlu0 %v1252, 16
        %v1344 = vpop.permute.xlu0 %1343
        %1345 = vrot.lane.b32.xlu0 %v1260, 16
        %v1346 = vpop.permute.xlu0 %1345
        %1347 = vrot.lane.b32.xlu0 %v1268, 16
        %v1348 = vpop.permute.xlu0 %1347
        %1349 = vrot.lane.b32.xlu0 %v1276, 16
        %v1350 = vpop.permute.xlu0 %1349
        %1351 = vrot.lane.b32.xlu0 %v1284, 16
        %v1352 = vpop.permute.xlu0 %1351
        %1353 = vrot.lane.b32.xlu0 %v1292, 16
        %v1354 = vpop.permute.xlu0 %1353
        %1355 = vrot.lane.b32.xlu0 %v1300, 16
        %v1356 = vpop.permute.xlu0 %1355
        %1357 = vrot.lane.b32.xlu0 %v1308, 16
        %v1358 = vpop.permute.xlu0 %1357
        %1359 = vrot.lane.b32.xlu0 %v1316, 16
        %v1360 = vpop.permute.xlu0 %1359
        %1361 = vrot.lane.b32.xlu0 %v1324, 16
        %v1362 = vpop.permute.xlu0 %1361
        %1363 = vrot.lane.b32.xlu0 %v1332, 16
        %v1364 = vpop.permute.xlu0 %1363
        %v1381 = vunpack.c.l.b16 %v451
        %v1382 = vunpack.c.l.b16 %v452
        %v1383 = vunpack.c.l.b16 %v453
        %v1384 = vunpack.c.l.b16 %v454
        %v1385 = vunpack.c.l.b16 %v455
        %v1386 = vunpack.c.l.b16 %v456
        %v1387 = vunpack.c.l.b16 %v457
        %v1388 = vunpack.c.l.b16 %v458
        %v1389 = vunpack.c.l.b16 %v459
        %v1390 = vunpack.c.l.b16 %v460
        %v1391 = vunpack.c.l.b16 %v461
        %v1392 = vunpack.c.l.b16 %v462
        %v1393 = vunpack.c.l.b16 %v463
        %v1394 = vunpack.c.l.b16 %v464
        %v1395 = vunpack.c.l.b16 %v465
        %v1396 = vunpack.c.l.b16 %v466
        %v1397 = vpack.c.b16 %v1381, %v1381
        %v1398 = vpack.c.b16 %v1382, %v1382
        %v1399 = vpack.c.b16 %v1383, %v1383
        %v1400 = vpack.c.b16 %v1384, %v1384
        %v1401 = vpack.c.b16 %v1385, %v1385
        %v1402 = vpack.c.b16 %v1386, %v1386
        %v1403 = vpack.c.b16 %v1387, %v1387
        %v1404 = vpack.c.b16 %v1388, %v1388
        %v1405 = vpack.c.b16 %v1389, %v1389
        %v1406 = vpack.c.b16 %v1390, %v1390
        %v1407 = vpack.c.b16 %v1391, %v1391
        %v1408 = vpack.c.b16 %v1392, %v1392
        %v1409 = vpack.c.b16 %v1393, %v1393
        %v1410 = vpack.c.b16 %v1394, %v1394
        %v1411 = vpack.c.b16 %v1395, %v1395
        %v1412 = vpack.c.b16 %v1396, %v1396
        %v1413 = vrot.slane %v1189, 5
        %v1414 = vrot.slane %v1397, 5
        %v1415 = vsel %vm884, %v1413, %v1414
        %v1416 = vrot.slane %v1190, 5
        %v1417 = vrot.slane %v1398, 5
        %v1418 = vsel %vm884, %v1416, %v1417
        %v1419 = vrot.slane %v1191, 5
        %v1420 = vrot.slane %v1399, 5
        %v1421 = vsel %vm884, %v1419, %v1420
        %v1422 = vrot.slane %v1192, 5
        %v1423 = vrot.slane %v1400, 5
        %v1424 = vsel %vm884, %v1422, %v1423
        %v1425 = vrot.slane %v1193, 5
        %v1426 = vrot.slane %v1401, 5
        %v1427 = vsel %vm884, %v1425, %v1426
        %v1428 = vrot.slane %v1194, 5
        %v1429 = vrot.slane %v1402, 5
        %v1430 = vsel %vm884, %v1428, %v1429
        %v1431 = vrot.slane %v1195, 5
        %v1432 = vrot.slane %v1403, 5
        %v1433 = vsel %vm884, %v1431, %v1432
        %v1434 = vrot.slane %v1196, 5
        %v1435 = vrot.slane %v1404, 5
        %v1436 = vsel %vm884, %v1434, %v1435
        %v1437 = vrot.slane %v1197, 5
        %v1438 = vrot.slane %v1405, 5
        %v1439 = vsel %vm884, %v1437, %v1438
        %v1440 = vrot.slane %v1198, 5
        %v1441 = vrot.slane %v1406, 5
        %v1442 = vsel %vm884, %v1440, %v1441
        %v1443 = vrot.slane %v1199, 5
        %v1444 = vrot.slane %v1407, 5
        %v1445 = vsel %vm884, %v1443, %v1444
        %v1446 = vrot.slane %v1200, 5
        %v1447 = vrot.slane %v1408, 5
        %v1448 = vsel %vm884, %v1446, %v1447
        %v1449 = vrot.slane %v1201, 5
        %v1450 = vrot.slane %v1409, 5
        %v1451 = vsel %vm884, %v1449, %v1450
        %v1452 = vrot.slane %v1202, 5
        %v1453 = vrot.slane %v1410, 5
        %v1454 = vsel %vm884, %v1452, %v1453
        %v1455 = vrot.slane %v1203, 5
        %v1456 = vrot.slane %v1411, 5
        %v1457 = vsel %vm884, %v1455, %v1456
        %v1458 = vrot.slane %v1204, 5
        %v1459 = vrot.slane %v1412, 5
        %v1460 = vsel %vm884, %v1458, %v1459
        %1461 = vrot.lane.b32.xlu0 %v1413, 20
        %v1462 = vpop.permute.xlu0 %1461
        %1463 = vrot.lane.b32.xlu0 %v1415, 20
        %v1464 = vpop.permute.xlu0 %1463
        %1465 = vrot.lane.b32.xlu0 %v1416, 20
        %v1466 = vpop.permute.xlu0 %1465
        %1467 = vrot.lane.b32.xlu0 %v1418, 20
        %v1468 = vpop.permute.xlu0 %1467
        %1469 = vrot.lane.b32.xlu0 %v1419, 20
        %v1470 = vpop.permute.xlu0 %1469
        %1471 = vrot.lane.b32.xlu0 %v1421, 20
        %v1472 = vpop.permute.xlu0 %1471
        %1473 = vrot.lane.b32.xlu0 %v1422, 20
        %v1474 = vpop.permute.xlu0 %1473
        %1475 = vrot.lane.b32.xlu0 %v1424, 20
        %v1476 = vpop.permute.xlu0 %1475
        %1477 = vrot.lane.b32.xlu0 %v1425, 20
        %v1478 = vpop.permute.xlu0 %1477
        %1479 = vrot.lane.b32.xlu0 %v1427, 20
        %v1480 = vpop.permute.xlu0 %1479
        %1481 = vrot.lane.b32.xlu0 %v1428, 20
        %v1482 = vpop.permute.xlu0 %1481
        %1483 = vrot.lane.b32.xlu0 %v1430, 20
        %v1484 = vpop.permute.xlu0 %1483
        %1485 = vrot.lane.b32.xlu0 %v1431, 20
        %v1486 = vpop.permute.xlu0 %1485
        %1487 = vrot.lane.b32.xlu0 %v1433, 20
        %v1488 = vpop.permute.xlu0 %1487
        %1489 = vrot.lane.b32.xlu0 %v1434, 20
        %v1490 = vpop.permute.xlu0 %1489
        %1491 = vrot.lane.b32.xlu0 %v1436, 20
        %v1492 = vpop.permute.xlu0 %1491
        %1493 = vrot.lane.b32.xlu0 %v1437, 20
        %v1494 = vpop.permute.xlu0 %1493
        %1495 = vrot.lane.b32.xlu0 %v1439, 20
        %v1496 = vpop.permute.xlu0 %1495
        %1497 = vrot.lane.b32.xlu0 %v1440, 20
        %v1498 = vpop.permute.xlu0 %1497
        %1499 = vrot.lane.b32.xlu0 %v1442, 20
        %v1500 = vpop.permute.xlu0 %1499
        %1501 = vrot.lane.b32.xlu0 %v1443, 20
        %v1502 = vpop.permute.xlu0 %1501
        %1503 = vrot.lane.b32.xlu0 %v1445, 20
        %v1504 = vpop.permute.xlu0 %1503
        %1505 = vrot.lane.b32.xlu0 %v1446, 20
        %v1506 = vpop.permute.xlu0 %1505
        %1507 = vrot.lane.b32.xlu0 %v1448, 20
        %v1508 = vpop.permute.xlu0 %1507
        %1509 = vrot.lane.b32.xlu0 %v1449, 20
        %v1510 = vpop.permute.xlu0 %1509
        %1511 = vrot.lane.b32.xlu0 %v1451, 20
        %v1512 = vpop.permute.xlu0 %1511
        %1513 = vrot.lane.b32.xlu0 %v1452, 20
        %v1514 = vpop.permute.xlu0 %1513
        %1515 = vrot.lane.b32.xlu0 %v1454, 20
        %v1516 = vpop.permute.xlu0 %1515
        %1517 = vrot.lane.b32.xlu0 %v1455, 20
        %v1518 = vpop.permute.xlu0 %1517
        %1519 = vrot.lane.b32.xlu0 %v1457, 20
        %v1520 = vpop.permute.xlu0 %1519
        %1521 = vrot.lane.b32.xlu0 %v1458, 20
        %v1522 = vpop.permute.xlu0 %1521
        %1523 = vrot.lane.b32.xlu0 %v1460, 20
        %v1524 = vpop.permute.xlu0 %1523
        %v1573 = vunpack.c.l.b16 %v468
        %v1574 = vunpack.c.l.b16 %v469
        %v1575 = vunpack.c.l.b16 %v470
        %v1576 = vunpack.c.l.b16 %v471
        %v1577 = vunpack.c.l.b16 %v472
        %v1578 = vunpack.c.l.b16 %v473
        %v1579 = vunpack.c.l.b16 %v474
        %v1580 = vunpack.c.l.b16 %v475
        %v1581 = vunpack.c.l.b16 %v476
        %v1582 = vunpack.c.l.b16 %v477
        %v1583 = vunpack.c.l.b16 %v478
        %v1584 = vunpack.c.l.b16 %v479
        %v1585 = vunpack.c.l.b16 %v480
        %v1586 = vunpack.c.l.b16 %v481
        %v1587 = vunpack.c.l.b16 %v482
        %v1588 = vunpack.c.l.b16 %v483
        %v1589 = vunpack.c.l.b16 %v484
        %v1590 = vunpack.c.l.b16 %v485
        %v1591 = vunpack.c.l.b16 %v486
        %v1592 = vunpack.c.l.b16 %v487
        %v1593 = vunpack.c.l.b16 %v488
        %v1594 = vunpack.c.l.b16 %v489
        %v1595 = vunpack.c.l.b16 %v490
        %v1596 = vunpack.c.l.b16 %v491
        %v1597 = vunpack.c.l.b16 %v492
        %v1598 = vunpack.c.l.b16 %v493
        %v1599 = vunpack.c.l.b16 %v494
        %v1600 = vunpack.c.l.b16 %v495
        %v1601 = vunpack.c.l.b16 %v496
        %v1602 = vunpack.c.l.b16 %v497
        %v1603 = vunpack.c.l.b16 %v498
        %v1604 = vunpack.c.l.b16 %v499
        %v1605 = vunpack.c.l.b16 %v500
        %v1606 = vunpack.c.l.b16 %v501
        %v1607 = vunpack.c.l.b16 %v502
        %v1608 = vunpack.c.l.b16 %v503
        %v1609 = vunpack.c.l.b16 %v504
        %v1610 = vunpack.c.l.b16 %v505
        %v1611 = vunpack.c.l.b16 %v506
        %v1612 = vunpack.c.l.b16 %v507
        %v1613 = vunpack.c.l.b16 %v508
        %v1614 = vunpack.c.l.b16 %v509
        %v1615 = vunpack.c.l.b16 %v510
        %v1616 = vunpack.c.l.b16 %v511
        %v1617 = vunpack.c.l.b16 %v512
        %v1618 = vunpack.c.l.b16 %v513
        %v1619 = vunpack.c.l.b16 %v514
        %v1620 = vunpack.c.l.b16 %v515
        %v1621 = vpack.c.b16 %v1574, %v1573
        %v1622 = vpack.c.b16 %v1575, %v1575
        %v1623 = vpack.c.b16 %v1577, %v1576
        %v1624 = vpack.c.b16 %v1578, %v1578
        %v1625 = vpack.c.b16 %v1580, %v1579
        %v1626 = vpack.c.b16 %v1581, %v1581
        %v1627 = vpack.c.b16 %v1583, %v1582
        %v1628 = vpack.c.b16 %v1584, %v1584
        %v1629 = vpack.c.b16 %v1586, %v1585
        %v1630 = vpack.c.b16 %v1587, %v1587
        %v1631 = vpack.c.b16 %v1589, %v1588
        %v1632 = vpack.c.b16 %v1590, %v1590
        %v1633 = vpack.c.b16 %v1592, %v1591
        %v1634 = vpack.c.b16 %v1593, %v1593
        %v1635 = vpack.c.b16 %v1595, %v1594
        %v1636 = vpack.c.b16 %v1596, %v1596
        %v1637 = vpack.c.b16 %v1598, %v1597
        %v1638 = vpack.c.b16 %v1599, %v1599
        %v1639 = vpack.c.b16 %v1601, %v1600
        %v1640 = vpack.c.b16 %v1602, %v1602
        %v1641 = vpack.c.b16 %v1604, %v1603
        %v1642 = vpack.c.b16 %v1605, %v1605
        %v1643 = vpack.c.b16 %v1607, %v1606
        %v1644 = vpack.c.b16 %v1608, %v1608
        %v1645 = vpack.c.b16 %v1610, %v1609
        %v1646 = vpack.c.b16 %v1611, %v1611
        %v1647 = vpack.c.b16 %v1613, %v1612
        %v1648 = vpack.c.b16 %v1614, %v1614
        %v1649 = vpack.c.b16 %v1616, %v1615
        %v1650 = vpack.c.b16 %v1617, %v1617
        %v1651 = vpack.c.b16 %v1619, %v1618
        %v1652 = vpack.c.b16 %v1620, %v1620
        %1653 = vrot.lane.b32.xlu0 %v1621, 24
        %v1654 = vpop.permute.xlu0 %1653
        %1655 = vrot.lane.b32.xlu0 %v1622, 24
        %v1656 = vpop.permute.xlu0 %1655
        %1657 = vrot.lane.b32.xlu0 %v1623, 24
        %v1658 = vpop.permute.xlu0 %1657
        %1659 = vrot.lane.b32.xlu0 %v1624, 24
        %v1660 = vpop.permute.xlu0 %1659
        %1661 = vrot.lane.b32.xlu0 %v1625, 24
        %v1662 = vpop.permute.xlu0 %1661
        %1663 = vrot.lane.b32.xlu0 %v1626, 24
        %v1664 = vpop.permute.xlu0 %1663
        %1665 = vrot.lane.b32.xlu0 %v1627, 24
        %v1666 = vpop.permute.xlu0 %1665
        %1667 = vrot.lane.b32.xlu0 %v1628, 24
        %v1668 = vpop.permute.xlu0 %1667
        %1669 = vrot.lane.b32.xlu0 %v1629, 24
        %v1670 = vpop.permute.xlu0 %1669
        %1671 = vrot.lane.b32.xlu0 %v1630, 24
        %v1672 = vpop.permute.xlu0 %1671
        %1673 = vrot.lane.b32.xlu0 %v1631, 24
        %v1674 = vpop.permute.xlu0 %1673
        %1675 = vrot.lane.b32.xlu0 %v1632, 24
        %v1676 = vpop.permute.xlu0 %1675
        %1677 = vrot.lane.b32.xlu0 %v1633, 24
        %v1678 = vpop.permute.xlu0 %1677
        %1679 = vrot.lane.b32.xlu0 %v1634, 24
        %v1680 = vpop.permute.xlu0 %1679
        %1681 = vrot.lane.b32.xlu0 %v1635, 24
        %v1682 = vpop.permute.xlu0 %1681
        %1683 = vrot.lane.b32.xlu0 %v1636, 24
        %v1684 = vpop.permute.xlu0 %1683
        %1685 = vrot.lane.b32.xlu0 %v1637, 24
        %v1686 = vpop.permute.xlu0 %1685
        %1687 = vrot.lane.b32.xlu0 %v1638, 24
        %v1688 = vpop.permute.xlu0 %1687
        %1689 = vrot.lane.b32.xlu0 %v1639, 24
        %v1690 = vpop.permute.xlu0 %1689
        %1691 = vrot.lane.b32.xlu0 %v1640, 24
        %v1692 = vpop.permute.xlu0 %1691
        %1693 = vrot.lane.b32.xlu0 %v1641, 24
        %v1694 = vpop.permute.xlu0 %1693
        %1695 = vrot.lane.b32.xlu0 %v1642, 24
        %v1696 = vpop.permute.xlu0 %1695
        %1697 = vrot.lane.b32.xlu0 %v1643, 24
        %v1698 = vpop.permute.xlu0 %1697
        %1699 = vrot.lane.b32.xlu0 %v1644, 24
        %v1700 = vpop.permute.xlu0 %1699
        %1701 = vrot.lane.b32.xlu0 %v1645, 24
        %v1702 = vpop.permute.xlu0 %1701
        %1703 = vrot.lane.b32.xlu0 %v1646, 24
        %v1704 = vpop.permute.xlu0 %1703
        %1705 = vrot.lane.b32.xlu0 %v1647, 24
        %v1706 = vpop.permute.xlu0 %1705
        %1707 = vrot.lane.b32.xlu0 %v1648, 24
        %v1708 = vpop.permute.xlu0 %1707
        %1709 = vrot.lane.b32.xlu0 %v1649, 24
        %v1710 = vpop.permute.xlu0 %1709
        %1711 = vrot.lane.b32.xlu0 %v1650, 24
        %v1712 = vpop.permute.xlu0 %1711
        %1713 = vrot.lane.b32.xlu0 %v1651, 24
        %v1714 = vpop.permute.xlu0 %1713
        %1715 = vrot.lane.b32.xlu0 %v1652, 24
        %v1716 = vpop.permute.xlu0 %1715
        %v1717 = vpack.c.b16 %v1575, %v1574
        %v1718 = vpack.c.b16 %v1578, %v1577
        %v1719 = vpack.c.b16 %v1581, %v1580
        %v1720 = vpack.c.b16 %v1584, %v1583
        %v1721 = vpack.c.b16 %v1587, %v1586
        %v1722 = vpack.c.b16 %v1590, %v1589
        %v1723 = vpack.c.b16 %v1593, %v1592
        %v1724 = vpack.c.b16 %v1596, %v1595
        %v1725 = vpack.c.b16 %v1599, %v1598
        %v1726 = vpack.c.b16 %v1602, %v1601
        %v1727 = vpack.c.b16 %v1605, %v1604
        %v1728 = vpack.c.b16 %v1608, %v1607
        %v1729 = vpack.c.b16 %v1611, %v1610
        %v1730 = vpack.c.b16 %v1614, %v1613
        %v1731 = vpack.c.b16 %v1617, %v1616
        %v1732 = vpack.c.b16 %v1620, %v1619
        %v1734 = vshrl.u32 %v1717, 16
        %v1736 = vrot.slane %v1734, 4
        %v1737 = vshll.u32 %v1717, 16
        %v1739 = vrot.slane %v1737, 5
        %v1740 = vor.u32 %v1736, %v1739
        %v1742 = vshrl.u32 %v1718, 16
        %v1744 = vrot.slane %v1742, 4
        %v1745 = vshll.u32 %v1718, 16
        %v1747 = vrot.slane %v1745, 5
        %v1748 = vor.u32 %v1744, %v1747
        %v1750 = vshrl.u32 %v1719, 16
        %v1752 = vrot.slane %v1750, 4
        %v1753 = vshll.u32 %v1719, 16
        %v1755 = vrot.slane %v1753, 5
        %v1756 = vor.u32 %v1752, %v1755
        %v1758 = vshrl.u32 %v1720, 16
        %v1760 = vrot.slane %v1758, 4
        %v1761 = vshll.u32 %v1720, 16
        %v1763 = vrot.slane %v1761, 5
        %v1764 = vor.u32 %v1760, %v1763
        %v1766 = vshrl.u32 %v1721, 16
        %v1768 = vrot.slane %v1766, 4
        %v1769 = vshll.u32 %v1721, 16
        %v1771 = vrot.slane %v1769, 5
        %v1772 = vor.u32 %v1768, %v1771
        %v1774 = vshrl.u32 %v1722, 16
        %v1776 = vrot.slane %v1774, 4
        %v1777 = vshll.u32 %v1722, 16
        %v1779 = vrot.slane %v1777, 5
        %v1780 = vor.u32 %v1776, %v1779
        %v1782 = vshrl.u32 %v1723, 16
        %v1784 = vrot.slane %v1782, 4
        %v1785 = vshll.u32 %v1723, 16
        %v1787 = vrot.slane %v1785, 5
        %v1788 = vor.u32 %v1784, %v1787
        %v1790 = vshrl.u32 %v1724, 16
        %v1792 = vrot.slane %v1790, 4
        %v1793 = vshll.u32 %v1724, 16
        %v1795 = vrot.slane %v1793, 5
        %v1796 = vor.u32 %v1792, %v1795
        %v1798 = vshrl.u32 %v1725, 16
        %v1800 = vrot.slane %v1798, 4
        %v1801 = vshll.u32 %v1725, 16
        %v1803 = vrot.slane %v1801, 5
        %v1804 = vor.u32 %v1800, %v1803
        %v1806 = vshrl.u32 %v1726, 16
        %v1808 = vrot.slane %v1806, 4
        %v1809 = vshll.u32 %v1726, 16
        %v1811 = vrot.slane %v1809, 5
        %v1812 = vor.u32 %v1808, %v1811
        %v1814 = vshrl.u32 %v1727, 16
        %v1816 = vrot.slane %v1814, 4
        %v1817 = vshll.u32 %v1727, 16
        %v1819 = vrot.slane %v1817, 5
        %v1820 = vor.u32 %v1816, %v1819
        %v1822 = vshrl.u32 %v1728, 16
        %v1824 = vrot.slane %v1822, 4
        %v1825 = vshll.u32 %v1728, 16
        %v1827 = vrot.slane %v1825, 5
        %v1828 = vor.u32 %v1824, %v1827
        %v1830 = vshrl.u32 %v1729, 16
        %v1832 = vrot.slane %v1830, 4
        %v1833 = vshll.u32 %v1729, 16
        %v1835 = vrot.slane %v1833, 5
        %v1836 = vor.u32 %v1832, %v1835
        %v1838 = vshrl.u32 %v1730, 16
        %v1840 = vrot.slane %v1838, 4
        %v1841 = vshll.u32 %v1730, 16
        %v1843 = vrot.slane %v1841, 5
        %v1844 = vor.u32 %v1840, %v1843
        %v1846 = vshrl.u32 %v1731, 16
        %v1848 = vrot.slane %v1846, 4
        %v1849 = vshll.u32 %v1731, 16
        %v1851 = vrot.slane %v1849, 5
        %v1852 = vor.u32 %v1848, %v1851
        %v1854 = vshrl.u32 %v1732, 16
        %v1856 = vrot.slane %v1854, 4
        %v1857 = vshll.u32 %v1732, 16
        %v1859 = vrot.slane %v1857, 5
        %v1860 = vor.u32 %v1856, %v1859
        %1861 = vrot.lane.b32.xlu0 %v1740, 28
        %v1862 = vpop.permute.xlu0 %1861
        %1863 = vrot.lane.b32.xlu0 %v1748, 28
        %v1864 = vpop.permute.xlu0 %1863
        %1865 = vrot.lane.b32.xlu0 %v1756, 28
        %v1866 = vpop.permute.xlu0 %1865
        %1867 = vrot.lane.b32.xlu0 %v1764, 28
        %v1868 = vpop.permute.xlu0 %1867
        %1869 = vrot.lane.b32.xlu0 %v1772, 28
        %v1870 = vpop.permute.xlu0 %1869
        %1871 = vrot.lane.b32.xlu0 %v1780, 28
        %v1872 = vpop.permute.xlu0 %1871
        %1873 = vrot.lane.b32.xlu0 %v1788, 28
        %v1874 = vpop.permute.xlu0 %1873
        %1875 = vrot.lane.b32.xlu0 %v1796, 28
        %v1876 = vpop.permute.xlu0 %1875
        %1877 = vrot.lane.b32.xlu0 %v1804, 28
        %v1878 = vpop.permute.xlu0 %1877
        %1879 = vrot.lane.b32.xlu0 %v1812, 28
        %v1880 = vpop.permute.xlu0 %1879
        %1881 = vrot.lane.b32.xlu0 %v1820, 28
        %v1882 = vpop.permute.xlu0 %1881
        %1883 = vrot.lane.b32.xlu0 %v1828, 28
        %v1884 = vpop.permute.xlu0 %1883
        %1885 = vrot.lane.b32.xlu0 %v1836, 28
        %v1886 = vpop.permute.xlu0 %1885
        %1887 = vrot.lane.b32.xlu0 %v1844, 28
        %v1888 = vpop.permute.xlu0 %1887
        %1889 = vrot.lane.b32.xlu0 %v1852, 28
        %v1890 = vpop.permute.xlu0 %1889
        %1891 = vrot.lane.b32.xlu0 %v1860, 28
        %v1892 = vpop.permute.xlu0 %1891
        %v1909 = vunpack.c.l.b16 %v516
        %v1910 = vunpack.c.l.b16 %v517
        %v1911 = vunpack.c.l.b16 %v518
        %v1912 = vunpack.c.l.b16 %v519
        %v1913 = vunpack.c.l.b16 %v520
        %v1914 = vunpack.c.l.b16 %v521
        %v1915 = vunpack.c.l.b16 %v522
        %v1916 = vunpack.c.l.b16 %v523
        %v1917 = vunpack.c.l.b16 %v524
        %v1918 = vunpack.c.l.b16 %v525
        %v1919 = vunpack.c.l.b16 %v526
        %v1920 = vunpack.c.l.b16 %v527
        %v1921 = vunpack.c.l.b16 %v528
        %v1922 = vunpack.c.l.b16 %v529
        %v1923 = vunpack.c.l.b16 %v530
        %v1924 = vunpack.c.l.b16 %v531
        %v1925 = vpack.c.b16 %v1909, %v1909
        %v1926 = vpack.c.b16 %v1910, %v1910
        %v1927 = vpack.c.b16 %v1911, %v1911
        %v1928 = vpack.c.b16 %v1912, %v1912
        %v1929 = vpack.c.b16 %v1913, %v1913
        %v1930 = vpack.c.b16 %v1914, %v1914
        %v1931 = vpack.c.b16 %v1915, %v1915
        %v1932 = vpack.c.b16 %v1916, %v1916
        %v1933 = vpack.c.b16 %v1917, %v1917
        %v1934 = vpack.c.b16 %v1918, %v1918
        %v1935 = vpack.c.b16 %v1919, %v1919
        %v1936 = vpack.c.b16 %v1920, %v1920
        %v1937 = vpack.c.b16 %v1921, %v1921
        %v1938 = vpack.c.b16 %v1922, %v1922
        %v1939 = vpack.c.b16 %v1923, %v1923
        %v1940 = vpack.c.b16 %v1924, %v1924
        %v1941 = vrot.slane %v1717, 5
        %v1942 = vrot.slane %v1925, 5
        %v1943 = vsel %vm884, %v1941, %v1942
        %v1944 = vrot.slane %v1718, 5
        %v1945 = vrot.slane %v1926, 5
        %v1946 = vsel %vm884, %v1944, %v1945
        %v1947 = vrot.slane %v1719, 5
        %v1948 = vrot.slane %v1927, 5
        %v1949 = vsel %vm884, %v1947, %v1948
        %v1950 = vrot.slane %v1720, 5
        %v1951 = vrot.slane %v1928, 5
        %v1952 = vsel %vm884, %v1950, %v1951
        %v1953 = vrot.slane %v1721, 5
        %v1954 = vrot.slane %v1929, 5
        %v1955 = vsel %vm884, %v1953, %v1954
        %v1956 = vrot.slane %v1722, 5
        %v1957 = vrot.slane %v1930, 5
        %v1958 = vsel %vm884, %v1956, %v1957
        %v1959 = vrot.slane %v1723, 5
        %v1960 = vrot.slane %v1931, 5
        %v1961 = vsel %vm884, %v1959, %v1960
        %v1962 = vrot.slane %v1724, 5
        %v1963 = vrot.slane %v1932, 5
        %v1964 = vsel %vm884, %v1962, %v1963
        %v1965 = vrot.slane %v1725, 5
        %v1966 = vrot.slane %v1933, 5
        %v1967 = vsel %vm884, %v1965, %v1966
        %v1968 = vrot.slane %v1726, 5
        %v1969 = vrot.slane %v1934, 5
        %v1970 = vsel %vm884, %v1968, %v1969
        %v1971 = vrot.slane %v1727, 5
        %v1972 = vrot.slane %v1935, 5
        %v1973 = vsel %vm884, %v1971, %v1972
        %v1974 = vrot.slane %v1728, 5
        %v1975 = vrot.slane %v1936, 5
        %v1976 = vsel %vm884, %v1974, %v1975
        %v1977 = vrot.slane %v1729, 5
        %v1978 = vrot.slane %v1937, 5
        %v1979 = vsel %vm884, %v1977, %v1978
        %v1980 = vrot.slane %v1730, 5
        %v1981 = vrot.slane %v1938, 5
        %v1982 = vsel %vm884, %v1980, %v1981
        %v1983 = vrot.slane %v1731, 5
        %v1984 = vrot.slane %v1939, 5
        %v1985 = vsel %vm884, %v1983, %v1984
        %v1986 = vrot.slane %v1732, 5
        %v1987 = vrot.slane %v1940, 5
        %v1988 = vsel %vm884, %v1986, %v1987
        %1989 = vrot.lane.b32.xlu0 %v1941, 32
        %v1990 = vpop.permute.xlu0 %1989
        %1991 = vrot.lane.b32.xlu0 %v1943, 32
        %v1992 = vpop.permute.xlu0 %1991
        %1993 = vrot.lane.b32.xlu0 %v1944, 32
        %v1994 = vpop.permute.xlu0 %1993
        %1995 = vrot.lane.b32.xlu0 %v1946, 32
        %v1996 = vpop.permute.xlu0 %1995
        %1997 = vrot.lane.b32.xlu0 %v1947, 32
        %v1998 = vpop.permute.xlu0 %1997
        %1999 = vrot.lane.b32.xlu0 %v1949, 32
        %v2000 = vpop.permute.xlu0 %1999
        %2001 = vrot.lane.b32.xlu0 %v1950, 32
        %v2002 = vpop.permute.xlu0 %2001
        %2003 = vrot.lane.b32.xlu0 %v1952, 32
        %v2004 = vpop.permute.xlu0 %2003
        %2005 = vrot.lane.b32.xlu0 %v1953, 32
        %v2006 = vpop.permute.xlu0 %2005
        %2007 = vrot.lane.b32.xlu0 %v1955, 32
        %v2008 = vpop.permute.xlu0 %2007
        %2009 = vrot.lane.b32.xlu0 %v1956, 32
        %v2010 = vpop.permute.xlu0 %2009
        %2011 = vrot.lane.b32.xlu0 %v1958, 32
        %v2012 = vpop.permute.xlu0 %2011
        %2013 = vrot.lane.b32.xlu0 %v1959, 32
        %v2014 = vpop.permute.xlu0 %2013
        %2015 = vrot.lane.b32.xlu0 %v1961, 32
        %v2016 = vpop.permute.xlu0 %2015
        %2017 = vrot.lane.b32.xlu0 %v1962, 32
        %v2018 = vpop.permute.xlu0 %2017
        %2019 = vrot.lane.b32.xlu0 %v1964, 32
        %v2020 = vpop.permute.xlu0 %2019
        %2021 = vrot.lane.b32.xlu0 %v1965, 32
        %v2022 = vpop.permute.xlu0 %2021
        %2023 = vrot.lane.b32.xlu0 %v1967, 32
        %v2024 = vpop.permute.xlu0 %2023
        %2025 = vrot.lane.b32.xlu0 %v1968, 32
        %v2026 = vpop.permute.xlu0 %2025
        %2027 = vrot.lane.b32.xlu0 %v1970, 32
        %v2028 = vpop.permute.xlu0 %2027
        %2029 = vrot.lane.b32.xlu0 %v1971, 32
        %v2030 = vpop.permute.xlu0 %2029
        %2031 = vrot.lane.b32.xlu0 %v1973, 32
        %v2032 = vpop.permute.xlu0 %2031
        %2033 = vrot.lane.b32.xlu0 %v1974, 32
        %v2034 = vpop.permute.xlu0 %2033
        %2035 = vrot.lane.b32.xlu0 %v1976, 32
        %v2036 = vpop.permute.xlu0 %2035
        %2037 = vrot.lane.b32.xlu0 %v1977, 32
        %v2038 = vpop.permute.xlu0 %2037
        %2039 = vrot.lane.b32.xlu0 %v1979, 32
        %v2040 = vpop.permute.xlu0 %2039
        %2041 = vrot.lane.b32.xlu0 %v1980, 32
        %v2042 = vpop.permute.xlu0 %2041
        %2043 = vrot.lane.b32.xlu0 %v1982, 32
        %v2044 = vpop.permute.xlu0 %2043
        %2045 = vrot.lane.b32.xlu0 %v1983, 32
        %v2046 = vpop.permute.xlu0 %2045
        %2047 = vrot.lane.b32.xlu0 %v1985, 32
        %v2048 = vpop.permute.xlu0 %2047
        %2049 = vrot.lane.b32.xlu0 %v1986, 32
        %v2050 = vpop.permute.xlu0 %2049
        %2051 = vrot.lane.b32.xlu0 %v1988, 32
        %v2052 = vpop.permute.xlu0 %2051
        %vm2053 = vcmask 31744
        %v2056 = vsel %vm2053, %v628, %v805
        %v2058 = vsel %vm2053, %v629, %v805
        %v2061 = vsel %vm2053, %v630, %v807
        %v2063 = vsel %vm2053, %v631, %v807
        %v2066 = vsel %vm2053, %v632, %v809
        %v2068 = vsel %vm2053, %v633, %v809
        %v2071 = vsel %vm2053, %v634, %v811
        %v2073 = vsel %vm2053, %v635, %v811
        %v2076 = vsel %vm2053, %v636, %v813
        %v2078 = vsel %vm2053, %v637, %v813
        %v2081 = vsel %vm2053, %v638, %v815
        %v2083 = vsel %vm2053, %v639, %v815
        %v2086 = vsel %vm2053, %v640, %v817
        %v2088 = vsel %vm2053, %v641, %v817
        %v2091 = vsel %vm2053, %v642, %v819
        %v2093 = vsel %vm2053, %v643, %v819
        %v2096 = vsel %vm2053, %v644, %v821
        %v2098 = vsel %vm2053, %v645, %v821
        %v2101 = vsel %vm2053, %v646, %v823
        %v2103 = vsel %vm2053, %v647, %v823
        %v2106 = vsel %vm2053, %v648, %v825
        %v2108 = vsel %vm2053, %v649, %v825
        %v2111 = vsel %vm2053, %v650, %v827
        %v2113 = vsel %vm2053, %v651, %v827
        %v2116 = vsel %vm2053, %v652, %v829
        %v2118 = vsel %vm2053, %v653, %v829
        %v2121 = vsel %vm2053, %v654, %v831
        %v2123 = vsel %vm2053, %v655, %v831
        %v2126 = vsel %vm2053, %v656, %v833
        %v2128 = vsel %vm2053, %v657, %v833
        %v2131 = vsel %vm2053, %v658, %v835
        %v2133 = vsel %vm2053, %v659, %v835
        %vm2134 = vcmask 64512
        %v2136 = vsel %vm2134, %v2056, %v934
        %v2138 = vsel %vm2134, %v2058, %v936
        %v2140 = vsel %vm2134, %v2061, %v938
        %v2142 = vsel %vm2134, %v2063, %v940
        %v2144 = vsel %vm2134, %v2066, %v942
        %v2146 = vsel %vm2134, %v2068, %v944
        %v2148 = vsel %vm2134, %v2071, %v946
        %v2150 = vsel %vm2134, %v2073, %v948
        %v2152 = vsel %vm2134, %v2076, %v950
        %v2154 = vsel %vm2134, %v2078, %v952
        %v2156 = vsel %vm2134, %v2081, %v954
        %v2158 = vsel %vm2134, %v2083, %v956
        %v2160 = vsel %vm2134, %v2086, %v958
        %v2162 = vsel %vm2134, %v2088, %v960
        %v2164 = vsel %vm2134, %v2091, %v962
        %v2166 = vsel %vm2134, %v2093, %v964
        %v2168 = vsel %vm2134, %v2096, %v966
        %v2170 = vsel %vm2134, %v2098, %v968
        %v2172 = vsel %vm2134, %v2101, %v970
        %v2174 = vsel %vm2134, %v2103, %v972
        %v2176 = vsel %vm2134, %v2106, %v974
        %v2178 = vsel %vm2134, %v2108, %v976
        %v2180 = vsel %vm2134, %v2111, %v978
        %v2182 = vsel %vm2134, %v2113, %v980
        %v2184 = vsel %vm2134, %v2116, %v982
        %v2186 = vsel %vm2134, %v2118, %v984
        %v2188 = vsel %vm2134, %v2121, %v986
        %v2190 = vsel %vm2134, %v2123, %v988
        %v2192 = vsel %vm2134, %v2126, %v990
        %v2194 = vsel %vm2134, %v2128, %v992
        %v2196 = vsel %vm2134, %v2131, %v994
        %v2198 = vsel %vm2134, %v2133, %v996
        %vm2199 = vcmask 97280
        %v2201 = vsel %vm2199, %v2136, %v1126
        %v2203 = vsel %vm2199, %v2138, %v1128
        %v2205 = vsel %vm2199, %v2140, %v1130
        %v2207 = vsel %vm2199, %v2142, %v1132
        %v2209 = vsel %vm2199, %v2144, %v1134
        %v2211 = vsel %vm2199, %v2146, %v1136
        %v2213 = vsel %vm2199, %v2148, %v1138
        %v2215 = vsel %vm2199, %v2150, %v1140
        %v2217 = vsel %vm2199, %v2152, %v1142
        %v2219 = vsel %vm2199, %v2154, %v1144
        %v2221 = vsel %vm2199, %v2156, %v1146
        %v2223 = vsel %vm2199, %v2158, %v1148
        %v2225 = vsel %vm2199, %v2160, %v1150
        %v2227 = vsel %vm2199, %v2162, %v1152
        %v2229 = vsel %vm2199, %v2164, %v1154
        %v2231 = vsel %vm2199, %v2166, %v1156
        %v2233 = vsel %vm2199, %v2168, %v1158
        %v2235 = vsel %vm2199, %v2170, %v1160
        %v2237 = vsel %vm2199, %v2172, %v1162
        %v2239 = vsel %vm2199, %v2174, %v1164
        %v2241 = vsel %vm2199, %v2176, %v1166
        %v2243 = vsel %vm2199, %v2178, %v1168
        %v2245 = vsel %vm2199, %v2180, %v1170
        %v2247 = vsel %vm2199, %v2182, %v1172
        %v2249 = vsel %vm2199, %v2184, %v1174
        %v2251 = vsel %vm2199, %v2186, %v1176
        %v2253 = vsel %vm2199, %v2188, %v1178
        %v2255 = vsel %vm2199, %v2190, %v1180
        %v2257 = vsel %vm2199, %v2192, %v1182
        %v2259 = vsel %vm2199, %v2194, %v1184
        %v2261 = vsel %vm2199, %v2196, %v1186
        %v2263 = vsel %vm2199, %v2198, %v1188
        %vm2264 = vcmask 130048
        %v2266 = vsel %vm2264, %v2201, %v1334
        %v2267 = vsel %vm2264, %v2203, %v1334
        %v2269 = vsel %vm2264, %v2205, %v1336
        %v2270 = vsel %vm2264, %v2207, %v1336
        %v2272 = vsel %vm2264, %v2209, %v1338
        %v2273 = vsel %vm2264, %v2211, %v1338
        %v2275 = vsel %vm2264, %v2213, %v1340
        %v2276 = vsel %vm2264, %v2215, %v1340
        %v2278 = vsel %vm2264, %v2217, %v1342
        %v2279 = vsel %vm2264, %v2219, %v1342
        %v2281 = vsel %vm2264, %v2221, %v1344
        %v2282 = vsel %vm2264, %v2223, %v1344
        %v2284 = vsel %vm2264, %v2225, %v1346
        %v2285 = vsel %vm2264, %v2227, %v1346
        %v2287 = vsel %vm2264, %v2229, %v1348
        %v2288 = vsel %vm2264, %v2231, %v1348
        %v2290 = vsel %vm2264, %v2233, %v1350
        %v2291 = vsel %vm2264, %v2235, %v1350
        %v2293 = vsel %vm2264, %v2237, %v1352
        %v2294 = vsel %vm2264, %v2239, %v1352
        %v2296 = vsel %vm2264, %v2241, %v1354
        %v2297 = vsel %vm2264, %v2243, %v1354
        %v2299 = vsel %vm2264, %v2245, %v1356
        %v2300 = vsel %vm2264, %v2247, %v1356
        %v2302 = vsel %vm2264, %v2249, %v1358
        %v2303 = vsel %vm2264, %v2251, %v1358
        %v2305 = vsel %vm2264, %v2253, %v1360
        %v2306 = vsel %vm2264, %v2255, %v1360
        %v2308 = vsel %vm2264, %v2257, %v1362
        %v2309 = vsel %vm2264, %v2259, %v1362
        %v2311 = vsel %vm2264, %v2261, %v1364
        %v2312 = vsel %vm2264, %v2263, %v1364
        %vm2313 = vcmask 162816
        %v2315 = vsel %vm2313, %v2266, %v1462
        %v2317 = vsel %vm2313, %v2267, %v1464
        %v2319 = vsel %vm2313, %v2269, %v1466
        %v2321 = vsel %vm2313, %v2270, %v1468
        %v2323 = vsel %vm2313, %v2272, %v1470
        %v2325 = vsel %vm2313, %v2273, %v1472
        %v2327 = vsel %vm2313, %v2275, %v1474
        %v2329 = vsel %vm2313, %v2276, %v1476
        %v2331 = vsel %vm2313, %v2278, %v1478
        %v2333 = vsel %vm2313, %v2279, %v1480
        %v2335 = vsel %vm2313, %v2281, %v1482
        %v2337 = vsel %vm2313, %v2282, %v1484
        %v2339 = vsel %vm2313, %v2284, %v1486
        %v2341 = vsel %vm2313, %v2285, %v1488
        %v2343 = vsel %vm2313, %v2287, %v1490
        %v2345 = vsel %vm2313, %v2288, %v1492
        %v2347 = vsel %vm2313, %v2290, %v1494
        %v2349 = vsel %vm2313, %v2291, %v1496
        %v2351 = vsel %vm2313, %v2293, %v1498
        %v2353 = vsel %vm2313, %v2294, %v1500
        %v2355 = vsel %vm2313, %v2296, %v1502
        %v2357 = vsel %vm2313, %v2297, %v1504
        %v2359 = vsel %vm2313, %v2299, %v1506
        %v2361 = vsel %vm2313, %v2300, %v1508
        %v2363 = vsel %vm2313, %v2302, %v1510
        %v2365 = vsel %vm2313, %v2303, %v1512
        %v2367 = vsel %vm2313, %v2305, %v1514
        %v2369 = vsel %vm2313, %v2306, %v1516
        %v2371 = vsel %vm2313, %v2308, %v1518
        %v2373 = vsel %vm2313, %v2309, %v1520
        %v2375 = vsel %vm2313, %v2311, %v1522
        %v2377 = vsel %vm2313, %v2312, %v1524
        %vm2378 = vcmask 195584
        %v2380 = vsel %vm2378, %v2315, %v1654
        %v2382 = vsel %vm2378, %v2317, %v1656
        %v2384 = vsel %vm2378, %v2319, %v1658
        %v2386 = vsel %vm2378, %v2321, %v1660
        %v2388 = vsel %vm2378, %v2323, %v1662
        %v2390 = vsel %vm2378, %v2325, %v1664
        %v2392 = vsel %vm2378, %v2327, %v1666
        %v2394 = vsel %vm2378, %v2329, %v1668
        %v2396 = vsel %vm2378, %v2331, %v1670
        %v2398 = vsel %vm2378, %v2333, %v1672
        %v2400 = vsel %vm2378, %v2335, %v1674
        %v2402 = vsel %vm2378, %v2337, %v1676
        %v2404 = vsel %vm2378, %v2339, %v1678
        %v2406 = vsel %vm2378, %v2341, %v1680
        %v2408 = vsel %vm2378, %v2343, %v1682
        %v2410 = vsel %vm2378, %v2345, %v1684
        %v2412 = vsel %vm2378, %v2347, %v1686
        %v2414 = vsel %vm2378, %v2349, %v1688
        %v2416 = vsel %vm2378, %v2351, %v1690
        %v2418 = vsel %vm2378, %v2353, %v1692
        %v2420 = vsel %vm2378, %v2355, %v1694
        %v2422 = vsel %vm2378, %v2357, %v1696
        %v2424 = vsel %vm2378, %v2359, %v1698
        %v2426 = vsel %vm2378, %v2361, %v1700
        %v2428 = vsel %vm2378, %v2363, %v1702
        %v2430 = vsel %vm2378, %v2365, %v1704
        %v2432 = vsel %vm2378, %v2367, %v1706
        %v2434 = vsel %vm2378, %v2369, %v1708
        %v2436 = vsel %vm2378, %v2371, %v1710
        %v2438 = vsel %vm2378, %v2373, %v1712
        %v2440 = vsel %vm2378, %v2375, %v1714
        %v2442 = vsel %vm2378, %v2377, %v1716
        %vm2443 = vcmask 228352
        %v2445 = vsel %vm2443, %v2380, %v1862
        %v2446 = vsel %vm2443, %v2382, %v1862
        %v2448 = vsel %vm2443, %v2384, %v1864
        %v2449 = vsel %vm2443, %v2386, %v1864
        %v2451 = vsel %vm2443, %v2388, %v1866
        %v2452 = vsel %vm2443, %v2390, %v1866
        %v2454 = vsel %vm2443, %v2392, %v1868
        %v2455 = vsel %vm2443, %v2394, %v1868
        %v2457 = vsel %vm2443, %v2396, %v1870
        %v2458 = vsel %vm2443, %v2398, %v1870
        %v2460 = vsel %vm2443, %v2400, %v1872
        %v2461 = vsel %vm2443, %v2402, %v1872
        %v2463 = vsel %vm2443, %v2404, %v1874
        %v2464 = vsel %vm2443, %v2406, %v1874
        %v2466 = vsel %vm2443, %v2408, %v1876
        %v2467 = vsel %vm2443, %v2410, %v1876
        %v2469 = vsel %vm2443, %v2412, %v1878
        %v2470 = vsel %vm2443, %v2414, %v1878
        %v2472 = vsel %vm2443, %v2416, %v1880
        %v2473 = vsel %vm2443, %v2418, %v1880
        %v2475 = vsel %vm2443, %v2420, %v1882
        %v2476 = vsel %vm2443, %v2422, %v1882
        %v2478 = vsel %vm2443, %v2424, %v1884
        %v2479 = vsel %vm2443, %v2426, %v1884
        %v2481 = vsel %vm2443, %v2428, %v1886
        %v2482 = vsel %vm2443, %v2430, %v1886
        %v2484 = vsel %vm2443, %v2432, %v1888
        %v2485 = vsel %vm2443, %v2434, %v1888
        %v2487 = vsel %vm2443, %v2436, %v1890
        %v2488 = vsel %vm2443, %v2438, %v1890
        %v2490 = vsel %vm2443, %v2440, %v1892
        %v2491 = vsel %vm2443, %v2442, %v1892
        %vm2492 = vcmask 261120
        %v2494 = vsel %vm2492, %v2445, %v1990
        %v2496 = vsel %vm2492, %v2446, %v1992
        %v2498 = vsel %vm2492, %v2448, %v1994
        %v2500 = vsel %vm2492, %v2449, %v1996
        %v2502 = vsel %vm2492, %v2451, %v1998
        %v2504 = vsel %vm2492, %v2452, %v2000
        %v2506 = vsel %vm2492, %v2454, %v2002
        %v2508 = vsel %vm2492, %v2455, %v2004
        %v2510 = vsel %vm2492, %v2457, %v2006
        %v2512 = vsel %vm2492, %v2458, %v2008
        %v2514 = vsel %vm2492, %v2460, %v2010
        %v2516 = vsel %vm2492, %v2461, %v2012
        %v2518 = vsel %vm2492, %v2463, %v2014
        %v2520 = vsel %vm2492, %v2464, %v2016
        %v2522 = vsel %vm2492, %v2466, %v2018
        %v2524 = vsel %vm2492, %v2467, %v2020
        %v2526 = vsel %vm2492, %v2469, %v2022
        %v2528 = vsel %vm2492, %v2470, %v2024
        %v2530 = vsel %vm2492, %v2472, %v2026
        %v2532 = vsel %vm2492, %v2473, %v2028
        %v2534 = vsel %vm2492, %v2475, %v2030
        %v2536 = vsel %vm2492, %v2476, %v2032
        %v2538 = vsel %vm2492, %v2478, %v2034
        %v2540 = vsel %vm2492, %v2479, %v2036
        %v2542 = vsel %vm2492, %v2481, %v2038
        %v2544 = vsel %vm2492, %v2482, %v2040
        %v2546 = vsel %vm2492, %v2484, %v2042
        %v2548 = vsel %vm2492, %v2485, %v2044
        %v2550 = vsel %vm2492, %v2487, %v2046
        %v2552 = vsel %vm2492, %v2488, %v2048
        %v2554 = vsel %vm2492, %v2490, %v2050
        %v2556 = vsel %vm2492, %v2491, %v2052
        %vm2557 = vsmask.f32 4352
        %v2558 = vshrl.u32 %v2494, 16
        %v2560 = vrot.slane %v2558, 3
        %v2561 = vshll.u32 %v2494, 16
        %v2563 = vrot.slane %v2561, 4
        %v2564 = vor.u32 %v2560, %v2563
        %v2565 = vshrl.u32 %v2496, 16
        %v2567 = vrot.slane %v2565, 3
        %v2568 = vshll.u32 %v2496, 16
        %v2570 = vrot.slane %v2568, 4
        %v2571 = vor.u32 %v2567, %v2570
        %v2572 = vsel %vm2557, %v2564, %v2571
        %v2573 = vshrl.u32 %v2498, 16
        %v2575 = vrot.slane %v2573, 3
        %v2576 = vshll.u32 %v2498, 16
        %v2578 = vrot.slane %v2576, 4
        %v2579 = vor.u32 %v2575, %v2578
        %v2580 = vshrl.u32 %v2500, 16
        %v2582 = vrot.slane %v2580, 3
        %v2583 = vshll.u32 %v2500, 16
        %v2585 = vrot.slane %v2583, 4
        %v2586 = vor.u32 %v2582, %v2585
        %v2587 = vsel %vm2557, %v2579, %v2586
        %v2588 = vshrl.u32 %v2502, 16
        %v2590 = vrot.slane %v2588, 3
        %v2591 = vshll.u32 %v2502, 16
        %v2593 = vrot.slane %v2591, 4
        %v2594 = vor.u32 %v2590, %v2593
        %v2595 = vshrl.u32 %v2504, 16
        %v2597 = vrot.slane %v2595, 3
        %v2598 = vshll.u32 %v2504, 16
        %v2600 = vrot.slane %v2598, 4
        %v2601 = vor.u32 %v2597, %v2600
        %v2602 = vsel %vm2557, %v2594, %v2601
        %v2603 = vshrl.u32 %v2506, 16
        %v2605 = vrot.slane %v2603, 3
        %v2606 = vshll.u32 %v2506, 16
        %v2608 = vrot.slane %v2606, 4
        %v2609 = vor.u32 %v2605, %v2608
        %v2610 = vshrl.u32 %v2508, 16
        %v2612 = vrot.slane %v2610, 3
        %v2613 = vshll.u32 %v2508, 16
        %v2615 = vrot.slane %v2613, 4
        %v2616 = vor.u32 %v2612, %v2615
        %v2617 = vsel %vm2557, %v2609, %v2616
        %v2618 = vshrl.u32 %v2510, 16
        %v2620 = vrot.slane %v2618, 3
        %v2621 = vshll.u32 %v2510, 16
        %v2623 = vrot.slane %v2621, 4
        %v2624 = vor.u32 %v2620, %v2623
        %v2625 = vshrl.u32 %v2512, 16
        %v2627 = vrot.slane %v2625, 3
        %v2628 = vshll.u32 %v2512, 16
        %v2630 = vrot.slane %v2628, 4
        %v2631 = vor.u32 %v2627, %v2630
        %v2632 = vsel %vm2557, %v2624, %v2631
        %v2633 = vshrl.u32 %v2514, 16
        %v2635 = vrot.slane %v2633, 3
        %v2636 = vshll.u32 %v2514, 16
        %v2638 = vrot.slane %v2636, 4
        %v2639 = vor.u32 %v2635, %v2638
        %v2640 = vshrl.u32 %v2516, 16
        %v2642 = vrot.slane %v2640, 3
        %v2643 = vshll.u32 %v2516, 16
        %v2645 = vrot.slane %v2643, 4
        %v2646 = vor.u32 %v2642, %v2645
        %v2647 = vsel %vm2557, %v2639, %v2646
        %v2648 = vshrl.u32 %v2518, 16
        %v2650 = vrot.slane %v2648, 3
        %v2651 = vshll.u32 %v2518, 16
        %v2653 = vrot.slane %v2651, 4
        %v2654 = vor.u32 %v2650, %v2653
        %v2655 = vshrl.u32 %v2520, 16
        %v2657 = vrot.slane %v2655, 3
        %v2658 = vshll.u32 %v2520, 16
        %v2660 = vrot.slane %v2658, 4
        %v2661 = vor.u32 %v2657, %v2660
        %v2662 = vsel %vm2557, %v2654, %v2661
        %v2663 = vshrl.u32 %v2522, 16
        %v2665 = vrot.slane %v2663, 3
        %v2666 = vshll.u32 %v2522, 16
        %v2668 = vrot.slane %v2666, 4
        %v2669 = vor.u32 %v2665, %v2668
        %v2670 = vshrl.u32 %v2524, 16
        %v2672 = vrot.slane %v2670, 3
        %v2673 = vshll.u32 %v2524, 16
        %v2675 = vrot.slane %v2673, 4
        %v2676 = vor.u32 %v2672, %v2675
        %v2677 = vsel %vm2557, %v2669, %v2676
        %v2678 = vshrl.u32 %v2526, 16
        %v2680 = vrot.slane %v2678, 3
        %v2681 = vshll.u32 %v2526, 16
        %v2683 = vrot.slane %v2681, 4
        %v2684 = vor.u32 %v2680, %v2683
        %v2685 = vshrl.u32 %v2528, 16
        %v2687 = vrot.slane %v2685, 3
        %v2688 = vshll.u32 %v2528, 16
        %v2690 = vrot.slane %v2688, 4
        %v2691 = vor.u32 %v2687, %v2690
        %v2692 = vsel %vm2557, %v2684, %v2691
        %v2693 = vshrl.u32 %v2530, 16
        %v2695 = vrot.slane %v2693, 3
        %v2696 = vshll.u32 %v2530, 16
        %v2698 = vrot.slane %v2696, 4
        %v2699 = vor.u32 %v2695, %v2698
        %v2700 = vshrl.u32 %v2532, 16
        %v2702 = vrot.slane %v2700, 3
        %v2703 = vshll.u32 %v2532, 16
        %v2705 = vrot.slane %v2703, 4
        %v2706 = vor.u32 %v2702, %v2705
        %v2707 = vsel %vm2557, %v2699, %v2706
        %v2708 = vshrl.u32 %v2534, 16
        %v2710 = vrot.slane %v2708, 3
        %v2711 = vshll.u32 %v2534, 16
        %v2713 = vrot.slane %v2711, 4
        %v2714 = vor.u32 %v2710, %v2713
        %v2715 = vshrl.u32 %v2536, 16
        %v2717 = vrot.slane %v2715, 3
        %v2718 = vshll.u32 %v2536, 16
        %v2720 = vrot.slane %v2718, 4
        %v2721 = vor.u32 %v2717, %v2720
        %v2722 = vsel %vm2557, %v2714, %v2721
        %v2723 = vshrl.u32 %v2538, 16
        %v2725 = vrot.slane %v2723, 3
        %v2726 = vshll.u32 %v2538, 16
        %v2728 = vrot.slane %v2726, 4
        %v2729 = vor.u32 %v2725, %v2728
        %v2730 = vshrl.u32 %v2540, 16
        %v2732 = vrot.slane %v2730, 3
        %v2733 = vshll.u32 %v2540, 16
        %v2735 = vrot.slane %v2733, 4
        %v2736 = vor.u32 %v2732, %v2735
        %v2737 = vsel %vm2557, %v2729, %v2736
        %v2738 = vshrl.u32 %v2542, 16
        %v2740 = vrot.slane %v2738, 3
        %v2741 = vshll.u32 %v2542, 16
        %v2743 = vrot.slane %v2741, 4
        %v2744 = vor.u32 %v2740, %v2743
        %v2745 = vshrl.u32 %v2544, 16
        %v2747 = vrot.slane %v2745, 3
        %v2748 = vshll.u32 %v2544, 16
        %v2750 = vrot.slane %v2748, 4
        %v2751 = vor.u32 %v2747, %v2750
        %v2752 = vsel %vm2557, %v2744, %v2751
        %v2753 = vshrl.u32 %v2546, 16
        %v2755 = vrot.slane %v2753, 3
        %v2756 = vshll.u32 %v2546, 16
        %v2758 = vrot.slane %v2756, 4
        %v2759 = vor.u32 %v2755, %v2758
        %v2760 = vshrl.u32 %v2548, 16
        %v2762 = vrot.slane %v2760, 3
        %v2763 = vshll.u32 %v2548, 16
        %v2765 = vrot.slane %v2763, 4
        %v2766 = vor.u32 %v2762, %v2765
        %v2767 = vsel %vm2557, %v2759, %v2766
        %v2768 = vshrl.u32 %v2550, 16
        %v2770 = vrot.slane %v2768, 3
        %v2771 = vshll.u32 %v2550, 16
        %v2773 = vrot.slane %v2771, 4
        %v2774 = vor.u32 %v2770, %v2773
        %v2775 = vshrl.u32 %v2552, 16
        %v2777 = vrot.slane %v2775, 3
        %v2778 = vshll.u32 %v2552, 16
        %v2780 = vrot.slane %v2778, 4
        %v2781 = vor.u32 %v2777, %v2780
        %v2782 = vsel %vm2557, %v2774, %v2781
        %v2783 = vshrl.u32 %v2554, 16
        %v2785 = vrot.slane %v2783, 3
        %v2786 = vshll.u32 %v2554, 16
        %v2788 = vrot.slane %v2786, 4
        %v2789 = vor.u32 %v2785, %v2788
        %v2790 = vshrl.u32 %v2556, 16
        %v2792 = vrot.slane %v2790, 3
        %v2793 = vshll.u32 %v2556, 16
        %v2795 = vrot.slane %v2793, 4
        %v2796 = vor.u32 %v2792, %v2795
        %v2797 = vsel %vm2557, %v2789, %v2796
        %v2798 = vunpack.c.l.b16 %v2572
        %v2799 = vunpack.c.h.b16 %v2572
        %v2800 = vunpack.c.l.b16 %v2587
        %v2801 = vunpack.c.h.b16 %v2587
        %v2802 = vunpack.c.l.b16 %v2602
        %v2803 = vunpack.c.h.b16 %v2602
        %v2804 = vunpack.c.l.b16 %v2617
        %v2805 = vunpack.c.h.b16 %v2617
        %v2806 = vunpack.c.l.b16 %v2632
        %v2807 = vunpack.c.h.b16 %v2632
        %v2808 = vunpack.c.l.b16 %v2647
        %v2809 = vunpack.c.h.b16 %v2647
        %v2810 = vunpack.c.l.b16 %v2662
        %v2811 = vunpack.c.h.b16 %v2662
        %v2812 = vunpack.c.l.b16 %v2677
        %v2813 = vunpack.c.h.b16 %v2677
        %v2814 = vunpack.c.l.b16 %v2692
        %v2815 = vunpack.c.h.b16 %v2692
        %v2816 = vunpack.c.l.b16 %v2707
        %v2817 = vunpack.c.h.b16 %v2707
        %v2818 = vunpack.c.l.b16 %v2722
        %v2819 = vunpack.c.h.b16 %v2722
        %v2820 = vunpack.c.l.b16 %v2737
        %v2821 = vunpack.c.h.b16 %v2737
        %v2822 = vunpack.c.l.b16 %v2752
        %v2823 = vunpack.c.h.b16 %v2752
        %v2824 = vunpack.c.l.b16 %v2767
        %v2825 = vunpack.c.h.b16 %v2767
        %v2826 = vunpack.c.l.b16 %v2782
        %v2827 = vunpack.c.h.b16 %v2782
        %v2828 = vunpack.c.l.b16 %v2797
        %v2829 = vunpack.c.h.b16 %v2797
        %v2830 = vpack.c.b16 %v2798, %v2798
        %v2831 = vpack.c.b16 %v2799, %v2799
        %v2832 = vpack.c.b16 %v2800, %v2800
        %v2833 = vpack.c.b16 %v2801, %v2801
        %v2834 = vpack.c.b16 %v2802, %v2802
        %v2835 = vpack.c.b16 %v2803, %v2803
        %v2836 = vpack.c.b16 %v2804, %v2804
        %v2837 = vpack.c.b16 %v2805, %v2805
        %v2838 = vpack.c.b16 %v2806, %v2806
        %v2839 = vpack.c.b16 %v2807, %v2807
        %v2840 = vpack.c.b16 %v2808, %v2808
        %v2841 = vpack.c.b16 %v2809, %v2809
        %v2842 = vpack.c.b16 %v2810, %v2810
        %v2843 = vpack.c.b16 %v2811, %v2811
        %v2844 = vpack.c.b16 %v2812, %v2812
        %v2845 = vpack.c.b16 %v2813, %v2813
        %v2846 = vpack.c.b16 %v2814, %v2814
        %v2847 = vpack.c.b16 %v2815, %v2815
        %v2848 = vpack.c.b16 %v2816, %v2816
        %v2849 = vpack.c.b16 %v2817, %v2817
        %v2850 = vpack.c.b16 %v2818, %v2818
        %v2851 = vpack.c.b16 %v2819, %v2819
        %v2852 = vpack.c.b16 %v2820, %v2820
        %v2853 = vpack.c.b16 %v2821, %v2821
        %v2854 = vpack.c.b16 %v2822, %v2822
        %v2855 = vpack.c.b16 %v2823, %v2823
        %v2856 = vpack.c.b16 %v2824, %v2824
        %v2857 = vpack.c.b16 %v2825, %v2825
        %v2858 = vpack.c.b16 %v2826, %v2826
        %v2859 = vpack.c.b16 %v2827, %v2827
        %v2860 = vpack.c.b16 %v2828, %v2828
        %v2861 = vpack.c.b16 %v2829, %v2829
        %vm2894 = vcmask 289792
        %2895 = vst.msk [vmem:[#allocation3] sm:$0xf] %vm2894, %v2830
        %2896 = vst.msk [vmem:[#allocation3 + $0x4] sm:$0xf] %vm2894, %v2831
        %2897 = vst.msk [vmem:[#allocation3 + $0x8] sm:$0xf] %vm2894, %v2832
        %2898 = vst.msk [vmem:[#allocation3 + $0xc] sm:$0xf] %vm2894, %v2833
        %2899 = vst.msk [vmem:[#allocation3 + $0x10] sm:$0xf] %vm2894, %v2834
        %2900 = vst.msk [vmem:[#allocation3 + $0x14] sm:$0xf] %vm2894, %v2835
        %2901 = vst.msk [vmem:[#allocation3 + $0x18] sm:$0xf] %vm2894, %v2836
        %2902 = vst.msk [vmem:[#allocation3 + $0x1c] sm:$0xf] %vm2894, %v2837
        %2903 = vst.msk [vmem:[#allocation3 + $0x20] sm:$0xf] %vm2894, %v2838
        %2904 = vst.msk [vmem:[#allocation3 + $0x24] sm:$0xf] %vm2894, %v2839
        %2905 = vst.msk [vmem:[#allocation3 + $0x28] sm:$0xf] %vm2894, %v2840
        %2906 = vst.msk [vmem:[#allocation3 + $0x2c] sm:$0xf] %vm2894, %v2841
        %2907 = vst.msk [vmem:[#allocation3 + $0x30] sm:$0xf] %vm2894, %v2842
        %2908 = vst.msk [vmem:[#allocation3 + $0x34] sm:$0xf] %vm2894, %v2843
        %2909 = vst.msk [vmem:[#allocation3 + $0x38] sm:$0xf] %vm2894, %v2844
        %2910 = vst.msk [vmem:[#allocation3 + $0x3c] sm:$0xf] %vm2894, %v2845
        %2911 = vst.msk [vmem:[#allocation3 + $0x40] sm:$0xf] %vm2894, %v2846
        %2912 = vst.msk [vmem:[#allocation3 + $0x44] sm:$0xf] %vm2894, %v2847
        %2913 = vst.msk [vmem:[#allocation3 + $0x48] sm:$0xf] %vm2894, %v2848
        %2914 = vst.msk [vmem:[#allocation3 + $0x4c] sm:$0xf] %vm2894, %v2849
        %2915 = vst.msk [vmem:[#allocation3 + $0x50] sm:$0xf] %vm2894, %v2850
        %2916 = vst.msk [vmem:[#allocation3 + $0x54] sm:$0xf] %vm2894, %v2851
        %2917 = vst.msk [vmem:[#allocation3 + $0x58] sm:$0xf] %vm2894, %v2852
        %2918 = vst.msk [vmem:[#allocation3 + $0x5c] sm:$0xf] %vm2894, %v2853
        %2919 = vst.msk [vmem:[#allocation3 + $0x60] sm:$0xf] %vm2894, %v2854
        %2920 = vst.msk [vmem:[#allocation3 + $0x64] sm:$0xf] %vm2894, %v2855
        %2921 = vst.msk [vmem:[#allocation3 + $0x68] sm:$0xf] %vm2894, %v2856
        %2922 = vst.msk [vmem:[#allocation3 + $0x6c] sm:$0xf] %vm2894, %v2857
        %2923 = vst.msk [vmem:[#allocation3 + $0x70] sm:$0xf] %vm2894, %v2858
        %2924 = vst.msk [vmem:[#allocation3 + $0x74] sm:$0xf] %vm2894, %v2859
        %2925 = vst.msk [vmem:[#allocation3 + $0x78] sm:$0xf] %vm2894, %v2860
        %2926 = vst.msk [vmem:[#allocation3 + $0x7c] sm:$0xf] %vm2894, %v2861
      $region36: #{upsample_block.1} parent=31 // pred_fallthru
        _
      %v2927 = vld [vmem:[#allocation3] sm:$0xf]
      %v2928 = vld [vmem:[#allocation3 + $0x4] sm:$0xf]
      %v2929 = vld [vmem:[#allocation3 + $0x8] sm:$0xf]
      %v2930 = vld [vmem:[#allocation3 + $0xc] sm:$0xf]
      %v2931 = vld [vmem:[#allocation3 + $0x10] sm:$0xf]
      %v2932 = vld [vmem:[#allocation3 + $0x14] sm:$0xf]
      %v2933 = vld [vmem:[#allocation3 + $0x18] sm:$0xf]
      %v2934 = vld [vmem:[#allocation3 + $0x1c] sm:$0xf]
      %v2935 = vld [vmem:[#allocation3 + $0x20] sm:$0xf]
      %v2936 = vld [vmem:[#allocation3 + $0x24] sm:$0xf]
      %v2937 = vld [vmem:[#allocation3 + $0x28] sm:$0xf]
      %v2938 = vld [vmem:[#allocation3 + $0x2c] sm:$0xf]
      %v2939 = vld [vmem:[#allocation3 + $0x30] sm:$0xf]
      %v2940 = vld [vmem:[#allocation3 + $0x34] sm:$0xf]
      %v2941 = vld [vmem:[#allocation3 + $0x38] sm:$0xf]
      %v2942 = vld [vmem:[#allocation3 + $0x3c] sm:$0xf]
      %v2943 = vld [vmem:[#allocation3 + $0x40] sm:$0xf]
      %v2944 = vld [vmem:[#allocation3 + $0x44] sm:$0xf]
      %v2945 = vld [vmem:[#allocation3 + $0x48] sm:$0xf]
      %v2946 = vld [vmem:[#allocation3 + $0x4c] sm:$0xf]
      %v2947 = vld [vmem:[#allocation3 + $0x50] sm:$0xf]
      %v2948 = vld [vmem:[#allocation3 + $0x54] sm:$0xf]
      %v2949 = vld [vmem:[#allocation3 + $0x58] sm:$0xf]
      %v2950 = vld [vmem:[#allocation3 + $0x5c] sm:$0xf]
      %v2951 = vld [vmem:[#allocation3 + $0x60] sm:$0xf]
      %v2952 = vld [vmem:[#allocation3 + $0x64] sm:$0xf]
      %v2953 = vld [vmem:[#allocation3 + $0x68] sm:$0xf]
      %v2954 = vld [vmem:[#allocation3 + $0x6c] sm:$0xf]
      %v2955 = vld [vmem:[#allocation3 + $0x70] sm:$0xf]
      %v2956 = vld [vmem:[#allocation3 + $0x74] sm:$0xf]
      %v2957 = vld [vmem:[#allocation3 + $0x78] sm:$0xf]
      %v2958 = vld [vmem:[#allocation3 + $0x7c] sm:$0xf]
      %v2959 = vld [vmem:[%s214] sm:$0xf]
      %v2960 = vld [vmem:[%s214 + $0x4] sm:$0xf]
      %v2961 = vld [vmem:[%s214 + $0x8] sm:$0xf]
      %v2962 = vld [vmem:[%s214 + $0xc] sm:$0xf]
      %v2963 = vld [vmem:[%s214 + $0x10] sm:$0x3]
      %v2964 = vld [vmem:[%s217] sm:$0x1]
      %v2966 = vperm.slane %v2964, 0
      %v3000 = vunpack.c.l.b16 %v2927
      %v3001 = vunpack.c.l.b16 %v2928
      %v3002 = vunpack.c.l.b16 %v2929
      %v3003 = vunpack.c.l.b16 %v2930
      %v3004 = vunpack.c.l.b16 %v2931
      %v3005 = vunpack.c.l.b16 %v2932
      %v3006 = vunpack.c.l.b16 %v2933
      %v3007 = vunpack.c.l.b16 %v2934
      %v3008 = vunpack.c.l.b16 %v2935
      %v3009 = vunpack.c.l.b16 %v2936
      %v3010 = vunpack.c.l.b16 %v2937
      %v3011 = vunpack.c.l.b16 %v2938
      %v3012 = vunpack.c.l.b16 %v2939
      %v3013 = vunpack.c.l.b16 %v2940
      %v3014 = vunpack.c.l.b16 %v2941
      %v3015 = vunpack.c.l.b16 %v2942
      %v3016 = vunpack.c.l.b16 %v2943
      %v3017 = vunpack.c.l.b16 %v2944
      %v3018 = vunpack.c.l.b16 %v2945
      %v3019 = vunpack.c.l.b16 %v2946
      %v3020 = vunpack.c.l.b16 %v2947
      %v3021 = vunpack.c.l.b16 %v2948
      %v3022 = vunpack.c.l.b16 %v2949
      %v3023 = vunpack.c.l.b16 %v2950
      %v3024 = vunpack.c.l.b16 %v2951
      %v3025 = vunpack.c.l.b16 %v2952
      %v3026 = vunpack.c.l.b16 %v2953
      %v3027 = vunpack.c.l.b16 %v2954
      %v3028 = vunpack.c.l.b16 %v2955
      %v3029 = vunpack.c.l.b16 %v2956
      %v3030 = vunpack.c.l.b16 %v2957
      %v3031 = vunpack.c.l.b16 %v2958
      %v3032 = vpack.c.b16 %v3001, %v3000
      %v3033 = vpack.c.b16 %v3003, %v3002
      %v3034 = vpack.c.b16 %v3005, %v3004
      %v3035 = vpack.c.b16 %v3007, %v3006
      %v3036 = vpack.c.b16 %v3009, %v3008
      %v3037 = vpack.c.b16 %v3011, %v3010
      %v3038 = vpack.c.b16 %v3013, %v3012
      %v3039 = vpack.c.b16 %v3015, %v3014
      %v3040 = vpack.c.b16 %v3017, %v3016
      %v3041 = vpack.c.b16 %v3019, %v3018
      %v3042 = vpack.c.b16 %v3021, %v3020
      %v3043 = vpack.c.b16 %v3023, %v3022
      %v3044 = vpack.c.b16 %v3025, %v3024
      %v3045 = vpack.c.b16 %v3027, %v3026
      %v3046 = vpack.c.b16 %v3029, %v3028
      %v3047 = vpack.c.b16 %v3031, %v3030
      %v3053 = vunpack.c.l.b16 %v2959
      %v3054 = vunpack.c.l.b16 %v2960
      %v3055 = vunpack.c.l.b16 %v2961
      %v3056 = vunpack.c.l.b16 %v2962
      %v3057 = vunpack.c.l.b16 %v2963
      %v3058 = vpack.c.b16 %v3054, %v3053
      %v3059 = vpack.c.b16 %v3056, %v3055
      %v3060 = vpack.c.b16 %v3057, %v3057
      %vm3063 = vcmask 293888
      %v3065 = vsel %vm3063, %v3032, 0
      %v3068 = vsel %vm3063, %v3033, 0
      %v3071 = vsel %vm3063, %v3034, 0
      %v3074 = vsel %vm3063, %v3035, 0
      %v3077 = vsel %vm3063, %v3036, 0
      %v3080 = vsel %vm3063, %v3037, 0
      %v3083 = vsel %vm3063, %v3038, 0
      %v3086 = vsel %vm3063, %v3039, 0
      %v3089 = vsel %vm3063, %v3040, 0
      %v3092 = vsel %vm3063, %v3041, 0
      %v3095 = vsel %vm3063, %v3042, 0
      %v3098 = vsel %vm3063, %v3043, 0
      %v3101 = vsel %vm3063, %v3044, 0
      %v3104 = vsel %vm3063, %v3045, 0
      %v3107 = vsel %vm3063, %v3046, 0
      %v3110 = vsel %vm3063, %v3047, 0
      %vm3112 = vcmask 1041408
      %v3114 = vsel %vm3112, %v3060, 0
      %3116 = vmatpush.bf16.msra.mxu0 0
      %3117 = vmatpush.bf16.msra.mxu0 0
      %3118 = vmatpush.bf16.msra.mxu0 0
      %3119 = vmatpush.bf16.msra.mxu0 0
      %3120 = vmatpush.bf16.msra.mxu0 0
      %3121 = vmatpush.bf16.msra.mxu0 %v3114
      %3122 = vmatpush.bf16.msra.mxu0 %v3059
      %3123 = vmatpush.bf16.msra.mxu0 %v3058
      %3124 = vmatmul.bf16.gmra.mxu0 %v3065
      %v3125 = vpop.f32.mrf.mxu0
      %v3126 = vadd.f32 %v2966, %v3125
      %v3127 = vpop.f32.mrf.mxu0
      %v3128 = vadd.f32 %v2966, %v3127
      %3129 = vmatmul.bf16.gmra.mxu0 %v3068
      %v3130 = vpop.f32.mrf.mxu0
      %v3131 = vadd.f32 %v2966, %v3130
      %v3132 = vpop.f32.mrf.mxu0
      %v3133 = vadd.f32 %v2966, %v3132
      %3134 = vmatmul.bf16.gmra.mxu0 %v3071
      %v3135 = vpop.f32.mrf.mxu0
      %v3136 = vadd.f32 %v2966, %v3135
      %v3137 = vpop.f32.mrf.mxu0
      %v3138 = vadd.f32 %v2966, %v3137
      %3139 = vmatmul.bf16.gmra.mxu0 %v3074
      %v3140 = vpop.f32.mrf.mxu0
      %v3141 = vadd.f32 %v2966, %v3140
      %v3142 = vpop.f32.mrf.mxu0
      %v3143 = vadd.f32 %v2966, %v3142
      %3144 = vmatmul.bf16.gmra.mxu0 %v3077
      %v3145 = vpop.f32.mrf.mxu0
      %v3146 = vadd.f32 %v2966, %v3145
      %v3147 = vpop.f32.mrf.mxu0
      %v3148 = vadd.f32 %v2966, %v3147
      %3149 = vmatmul.bf16.gmra.mxu0 %v3080
      %v3150 = vpop.f32.mrf.mxu0
      %v3151 = vadd.f32 %v2966, %v3150
      %v3152 = vpop.f32.mrf.mxu0
      %v3153 = vadd.f32 %v2966, %v3152
      %3154 = vmatmul.bf16.gmra.mxu0 %v3083
      %v3155 = vpop.f32.mrf.mxu0
      %v3156 = vadd.f32 %v2966, %v3155
      %v3157 = vpop.f32.mrf.mxu0
      %v3158 = vadd.f32 %v2966, %v3157
      %3159 = vmatmul.bf16.gmra.mxu0 %v3086
      %v3160 = vpop.f32.mrf.mxu0
      %v3161 = vadd.f32 %v2966, %v3160
      %v3162 = vpop.f32.mrf.mxu0
      %v3163 = vadd.f32 %v2966, %v3162
      %3164 = vmatmul.bf16.gmra.mxu0 %v3089
      %v3165 = vpop.f32.mrf.mxu0
      %v3166 = vadd.f32 %v2966, %v3165
      %v3167 = vpop.f32.mrf.mxu0
      %v3168 = vadd.f32 %v2966, %v3167
      %3169 = vmatmul.bf16.gmra.mxu0 %v3092
      %v3170 = vpop.f32.mrf.mxu0
      %v3171 = vadd.f32 %v2966, %v3170
      %v3172 = vpop.f32.mrf.mxu0
      %v3173 = vadd.f32 %v2966, %v3172
      %3174 = vmatmul.bf16.gmra.mxu0 %v3095
      %v3175 = vpop.f32.mrf.mxu0
      %v3176 = vadd.f32 %v2966, %v3175
      %v3177 = vpop.f32.mrf.mxu0
      %v3178 = vadd.f32 %v2966, %v3177
      %3179 = vmatmul.bf16.gmra.mxu0 %v3098
      %v3180 = vpop.f32.mrf.mxu0
      %v3181 = vadd.f32 %v2966, %v3180
      %v3182 = vpop.f32.mrf.mxu0
      %v3183 = vadd.f32 %v2966, %v3182
      %3184 = vmatmul.bf16.gmra.mxu0 %v3101
      %v3185 = vpop.f32.mrf.mxu0
      %v3186 = vadd.f32 %v2966, %v3185
      %v3187 = vpop.f32.mrf.mxu0
      %v3188 = vadd.f32 %v2966, %v3187
      %3189 = vmatmul.bf16.gmra.mxu0 %v3104
      %v3190 = vpop.f32.mrf.mxu0
      %v3191 = vadd.f32 %v2966, %v3190
      %v3192 = vpop.f32.mrf.mxu0
      %v3193 = vadd.f32 %v2966, %v3192
      %3194 = vmatmul.bf16.gmra.mxu0 %v3107
      %v3195 = vpop.f32.mrf.mxu0
      %v3196 = vadd.f32 %v2966, %v3195
      %v3197 = vpop.f32.mrf.mxu0
      %v3198 = vadd.f32 %v2966, %v3197
      %3199 = vmatmul.bf16.gmra.mxu0 %v3110
      %v3200 = vpop.f32.mrf.mxu0
      %v3201 = vadd.f32 %v2966, %v3200
      %v3202 = vpop.f32.mrf.mxu0
      %v3203 = vadd.f32 %v2966, %v3202
      %3204 = vdwg.mxu0
      %v3205 = vmax.f32 %v3126, 0.0
      %v3206 = vmax.f32 %v3128, 0.0
      %v3207 = vmax.f32 %v3131, 0.0
      %v3208 = vmax.f32 %v3133, 0.0
      %v3209 = vmax.f32 %v3136, 0.0
      %v3210 = vmax.f32 %v3138, 0.0
      %v3211 = vmax.f32 %v3141, 0.0
      %v3212 = vmax.f32 %v3143, 0.0
      %v3213 = vmax.f32 %v3146, 0.0
      %v3214 = vmax.f32 %v3148, 0.0
      %v3215 = vmax.f32 %v3151, 0.0
      %v3216 = vmax.f32 %v3153, 0.0
      %v3217 = vmax.f32 %v3156, 0.0
      %v3218 = vmax.f32 %v3158, 0.0
      %v3219 = vmax.f32 %v3161, 0.0
      %v3220 = vmax.f32 %v3163, 0.0
      %v3221 = vmax.f32 %v3166, 0.0
      %v3222 = vmax.f32 %v3168, 0.0
      %v3223 = vmax.f32 %v3171, 0.0
      %v3224 = vmax.f32 %v3173, 0.0
      %v3225 = vmax.f32 %v3176, 0.0
      %v3226 = vmax.f32 %v3178, 0.0
      %v3227 = vmax.f32 %v3181, 0.0
      %v3228 = vmax.f32 %v3183, 0.0
      %v3229 = vmax.f32 %v3186, 0.0
      %v3230 = vmax.f32 %v3188, 0.0
      %v3231 = vmax.f32 %v3191, 0.0
      %v3232 = vmax.f32 %v3193, 0.0
      %v3233 = vmax.f32 %v3196, 0.0
      %v3234 = vmax.f32 %v3198, 0.0
      %v3235 = vmax.f32 %v3201, 0.0
      %v3236 = vmax.f32 %v3203, 0.0
      %v3237 = vpack.c.bf16 %v3205, %v3205
      %v3238 = vpack.c.bf16 %v3206, %v3206
      %v3239 = vpack.c.bf16 %v3207, %v3207
      %v3240 = vpack.c.bf16 %v3208, %v3208
      %v3241 = vpack.c.bf16 %v3209, %v3209
      %v3242 = vpack.c.bf16 %v3210, %v3210
      %v3243 = vpack.c.bf16 %v3211, %v3211
      %v3244 = vpack.c.bf16 %v3212, %v3212
      %v3245 = vpack.c.bf16 %v3213, %v3213
      %v3246 = vpack.c.bf16 %v3214, %v3214
      %v3247 = vpack.c.bf16 %v3215, %v3215
      %v3248 = vpack.c.bf16 %v3216, %v3216
      %v3249 = vpack.c.bf16 %v3217, %v3217
      %v3250 = vpack.c.bf16 %v3218, %v3218
      %v3251 = vpack.c.bf16 %v3219, %v3219
      %v3252 = vpack.c.bf16 %v3220, %v3220
      %v3253 = vpack.c.bf16 %v3221, %v3221
      %v3254 = vpack.c.bf16 %v3222, %v3222
      %v3255 = vpack.c.bf16 %v3223, %v3223
      %v3256 = vpack.c.bf16 %v3224, %v3224
      %v3257 = vpack.c.bf16 %v3225, %v3225
      %v3258 = vpack.c.bf16 %v3226, %v3226
      %v3259 = vpack.c.bf16 %v3227, %v3227
      %v3260 = vpack.c.bf16 %v3228, %v3228
      %v3261 = vpack.c.bf16 %v3229, %v3229
      %v3262 = vpack.c.bf16 %v3230, %v3230
      %v3263 = vpack.c.bf16 %v3231, %v3231
      %v3264 = vpack.c.bf16 %v3232, %v3232
      %v3265 = vpack.c.bf16 %v3233, %v3233
      %v3266 = vpack.c.bf16 %v3234, %v3234
      %v3267 = vpack.c.bf16 %v3235, %v3235
      %v3268 = vpack.c.bf16 %v3236, %v3236
      %3269 = vst [vmem:[%s226] sm:$0xf] %v3237
      %3270 = vst [vmem:[%s226 + $0x4] sm:$0xf] %v3238
      %3271 = vst [vmem:[%s226 + $0x8] sm:$0xf] %v3239
      %3272 = vst [vmem:[%s226 + $0xc] sm:$0xf] %v3240
      %3273 = vst [vmem:[%s226 + $0x10] sm:$0xf] %v3241
      %3274 = vst [vmem:[%s226 + $0x14] sm:$0xf] %v3242
      %3275 = vst [vmem:[%s226 + $0x18] sm:$0xf] %v3243
      %3276 = vst [vmem:[%s226 + $0x1c] sm:$0xf] %v3244
      %3277 = vst [vmem:[%s226 + $0x20] sm:$0xf] %v3245
      %3278 = vst [vmem:[%s226 + $0x24] sm:$0xf] %v3246
      %3279 = vst [vmem:[%s226 + $0x28] sm:$0xf] %v3247
      %3280 = vst [vmem:[%s226 + $0x2c] sm:$0xf] %v3248
      %3281 = vst [vmem:[%s226 + $0x30] sm:$0xf] %v3249
      %3282 = vst [vmem:[%s226 + $0x34] sm:$0xf] %v3250
      %3283 = vst [vmem:[%s226 + $0x38] sm:$0xf] %v3251
      %3284 = vst [vmem:[%s226 + $0x3c] sm:$0xf] %v3252
      %3285 = vst [vmem:[%s226 + $0x40] sm:$0xf] %v3253
      %3286 = vst [vmem:[%s226 + $0x44] sm:$0xf] %v3254
      %3287 = vst [vmem:[%s226 + $0x48] sm:$0xf] %v3255
      %3288 = vst [vmem:[%s226 + $0x4c] sm:$0xf] %v3256
      %3289 = vst [vmem:[%s226 + $0x50] sm:$0xf] %v3257
      %3290 = vst [vmem:[%s226 + $0x54] sm:$0xf] %v3258
      %3291 = vst [vmem:[%s226 + $0x58] sm:$0xf] %v3259
      %3292 = vst [vmem:[%s226 + $0x5c] sm:$0xf] %v3260
      %3293 = vst [vmem:[%s226 + $0x60] sm:$0xf] %v3261
      %3294 = vst [vmem:[%s226 + $0x64] sm:$0xf] %v3262
      %3295 = vst [vmem:[%s226 + $0x68] sm:$0xf] %v3263
      %3296 = vst [vmem:[%s226 + $0x6c] sm:$0xf] %v3264
      %3297 = vst [vmem:[%s226 + $0x70] sm:$0xf] %v3265
      %3298 = vst [vmem:[%s226 + $0x74] sm:$0xf] %v3266
      %3299 = vst [vmem:[%s226 + $0x78] sm:$0xf] %v3267
      %3300 = vst [vmem:[%s226 + $0x7c] sm:$0xf] %v3268
      %p3301 = scmp.lt.s32.totalorder %s18, 1
      %s3302 = scalar_select %p3301, %s18, 1
      %p3303 = scmp.lt.s32.totalorder %s19, 0
      %s3304 = scalar_select %p3303, %s19, 0
      %s3305 = smul.addr %s3304, 32
      %s3306 = smul.addr %s3302, 32
      %s3307 = sadd.s32 %s3305, %s3306
      %s3308 = smul.addr %s3307, 4
      %s3309 = scalar_lea.vmem %s3, %s3308
      // Predicated region
      $region37: #{upsample_block.1} parent=31 // pred_check
        %p3310 = pneg %p124
      $region38: #{upsample_block.1} parent=31 // pred_check_branch
        %3312 = sbr.rel (%p3310) target = $region40
      $region39: #{upsample_block.1} parent=31 // pred_region
        _
      $region40: #{upsample_block.1} parent=31 // pred_fallthru
        _
    $region32: #{upsample_block.1} parent=5 // pred_fallthru
      _
    %p3313 = scmp.le.s32.totalorder 2, %s9
    // Predicated region
    $region41: #{upsample_block.1} parent=5 // pred_check
      %p3314 = pneg %p3313
    $region42: #{upsample_block.1} parent=5 // pred_check_branch
      %3316 = sbr.rel (%p3314) target = $region44
    $region43: #{upsample_block.1} parent=5 // pred_region
      %s3317 = ssub.s32 %s9, 2
      // Predicated region
      $region45: #{upsample_block.1} parent=43 // pred_check
        %p3318 = pneg %p130
      $region46: #{upsample_block.1} parent=43 // pred_check_branch
        %3320 = sbr.rel (%p3318) target = $region48
      $region47: #{upsample_block.1} parent=43 // pred_region
        %p3321 = scmp.lt.s32.totalorder %s20, 1
        %s3322 = scalar_select %p3321, %s20, 1
        %p3323 = scmp.lt.s32.totalorder %s21, 0
        %s3324 = scalar_select %p3323, %s21, 0
        %s3325 = smul.addr %s3324, 32
        %s3326 = smul.addr %s3322, 32
        %s3327 = sadd.s32 %s3325, %s3326
        %s3328 = smul.addr %s3327, 4
        %s3329 = scalar_lea.vmem %s3, %s3328
      $region48: #{upsample_block.1} parent=43 // pred_fallthru
        _
    $region44: #{upsample_block.1} parent=5 // pred_fallthru
      _
  $region6: #{upsample_block.1} parent=0 // loop_footer
    %s13 = sadd.s32 1, %s9
  $region7: #{upsample_block.1} parent=0 // loop_footer_branch
    %8 = sbr.rel target = $region3
  $region8: #{upsample_block.1} parent=0 // loop_exit
    _

</llo_original>
